<compile_context>
chip_gen: v5e
topology: v5e:2x2
jax: 0.10.0
libtpu: 0.0.40
codegen_flags: <defaults>
</compile_context>

<pallas_src>
import functools

import jax
import jax.numpy as jnp
from jax import lax
from jax.experimental import pallas as pl
from jax.experimental.pallas import tpu as pltpu


def _layernorm(x, w, b, eps=1e-5):
    mu = jnp.mean(x, axis=-1, keepdims=True)
    var = jnp.mean((x - mu) ** 2, axis=-1, keepdims=True)
    return (x - mu) * lax.rsqrt(var + eps) * w + b


def _mm(x_bf, w_bf):
    """x (M,K) @ w (K,N): bf16 MXU inputs, f32 accumulation, default precision."""
    return jnp.dot(x_bf, w_bf, preferred_element_type=jnp.float32)


def decode_transformer_kernel(
    toks_ref, pos_ref, wtok_ref,
    wq_ref, wk_ref, wv_ref,
    ln0w_ref, ln0b_ref, ln1w_ref, ln1b_ref,
    w1_ref, b1_ref, w2_ref, b2_ref,
    lnfw_ref, lnfb_ref, wu_ref, bu_ref,
    out_ref,
    x_ref, attn_ref):
    layer = pl.program_id(1)
    num_layers = pl.num_programs(1)

    bt, seq, _ = toks_ref.shape
    n_heads, emb, hd = wq_ref.shape                    # (H, E, c) per-head slabs
    rows = bt * seq
    inv_scale = jnp.float32(1.0 / (hd ** 0.5))

    # ---- first layer step: token + positional embedding into the x scratch ----
    @pl.when(layer == 0)
    def _():
        toks = toks_ref[...].reshape(rows, toks_ref.shape[-1]).astype(wtok_ref.dtype)
        x_ref[...] = _mm(toks, wtok_ref[...]) + pos_ref[...]

    x_in = x_ref[...]                                  # (rows, E), f32

    # ---- attention sub-block:  a_res = x_in + MHA(LN0(x_in)) ----
    h = _layernorm(x_in, ln0w_ref[...], ln0b_ref[...])
    h_bf = h.astype(wq_ref.dtype)                      # cast once, shared by 3H dots

    qrow = lax.broadcasted_iota(jnp.int32, (seq, seq), 0)
    krow = lax.broadcasted_iota(jnp.int32, (seq, seq), 1)
    causal = krow <= qrow                              # key index <= query index
    neg_inf = jnp.float32(-jnp.inf)

    # NOTE: fully head-batched attention would need a (0,2,1,3) transpose of a 4-D
    # activation; instead each head uses its own (E, c) weight slab (no qkv column
    # slicing) and a leading-batch einsum over the folded batch dim.
    for head in range(n_heads):
        q = (_mm(h_bf, wq_ref[head]) * inv_scale).reshape(bt, seq, hd)
        k = _mm(h_bf, wk_ref[head]).reshape(bt, seq, hd)
        v = _mm(h_bf, wv_ref[head]).reshape(bt, seq, hd)
        s = jnp.einsum('btc,bsc->bts', q, k, preferred_element_type=jnp.float32)
        s = jnp.where(causal, s, neg_inf)
        m = jnp.max(s, axis=-1, keepdims=True)
        e = jnp.exp(s - m)
        p = e * pl.reciprocal(jnp.sum(e, axis=-1, keepdims=True), approx=True)
        y = jnp.einsum('bts,bsc->btc', p, v, preferred_element_type=jnp.float32)
        attn_ref[:, head * hd:(head + 1) * hd] = y.reshape(rows, hd)

    a_res = x_in + attn_ref[...]

    # ---- MLP sub-block:  a_res + W2(relu(W1(LN1(a_res)))) ----
    h2 = _layernorm(a_res, ln1w_ref[...], ln1b_ref[...]).astype(w1_ref.dtype)
    m1 = jnp.maximum(_mm(h2, w1_ref[...]) + b1_ref[...], 0.0)
    mlp_out = _mm(m1.astype(w2_ref.dtype), w2_ref[...]) + b2_ref[...]

    # DecodeTransformer.forward adds an extra outer residual: x = x + block(x)
    x_new = x_in + a_res + mlp_out
    x_ref[...] = x_new

    # ---- last layer step: final LayerNorm + unembedding (lane-dense padded V) ----
    @pl.when(layer == num_layers - 1)
    def _():
        hf = _layernorm(x_new, lnfw_ref[...], lnfb_ref[...]).astype(wu_ref.dtype)
        logits = _mm(hf, wu_ref[...]) + bu_ref[...]
        out_ref[...] = logits.reshape(bt, seq, wu_ref.shape[-1])


def _pick_batch_block(batch, seq, target_rows=128):
    """Largest divisor of `batch` keeping the folded row count <= target_rows."""
    best = 1
    for cand in range(1, batch + 1):
        if batch % cand == 0 and cand * seq <= max(target_rows, seq):
            best = cand
    return best


@functools.partial(jax.jit, static_argnames=("num_heads", "num_layers"))
def decode_transformer(toks, params, *, num_heads, num_layers):
    batch, seq, alpha = toks.shape
    emb = params["w_tok"].shape[0]
    mlp_size = params["w1"].shape[1]
    n_layers, n_heads = num_layers, num_heads
    hd = emb // n_heads

    bt = _pick_batch_block(batch, seq)                 # folded batch per grid step
    n_bb = batch // bt
    rows = bt * seq
    alpha_pad = ((alpha + 127) // 128) * 128           # lane-dense output slab

    f32, bf16 = jnp.float32, jnp.bfloat16

    # mirrors `self.postn_embedding.weight.T[:T, :]`, tiled over the folded batch
    pos = jnp.tile(params["w_pos"].T[:seq, :], (bt, 1)).astype(f32)        # (rows,E)
    wtok_t = params["w_tok"].T.astype(bf16)                                # (V, E)

    # torch attention weight rows per head are [q_h; k_h; v_h] (each (c, E));
    # pre-split into per-head (E, c) slabs in (in, out) layout.
    wa = params["w_attn"].reshape(n_layers, n_heads, 3, hd, emb)
    wq = jnp.transpose(wa[:, :, 0], (0, 1, 3, 2)).astype(bf16)             # (L,H,E,c)
    wk = jnp.transpose(wa[:, :, 1], (0, 1, 3, 2)).astype(bf16)
    wv = jnp.transpose(wa[:, :, 2], (0, 1, 3, 2)).astype(bf16)

    w1_t = jnp.transpose(params["w1"], (0, 2, 1)).astype(bf16)             # (L,E,M)
    w2_t = jnp.transpose(params["w2"], (0, 2, 1)).astype(bf16)             # (L,M,E)
    wu_t = jnp.pad(params["w_unemb"].T,
                   ((0, 0), (0, alpha_pad - alpha))).astype(bf16)          # (E,Vp)
    bu_p = jnp.pad(params["b_unemb"],
                   ((0, 0), (0, alpha_pad - alpha))).astype(f32)           # (1,Vp)

    def rep(shape):                      # whole array, same block every grid step
        nd = len(shape)
        return pl.BlockSpec(shape, lambda b, l, _n=nd: (0,) * _n)

    def per_layer(tail):                 # (L, *tail) array, streamed one layer/step
        zeros = (0,) * len(tail)
        return pl.BlockSpec((None,) + tuple(tail), lambda b, l, _z=zeros: (l,) + _z)

    in_specs = [
        pl.BlockSpec((bt, seq, alpha), lambda b, l: (b, 0, 0)),   # toks (batch block)
        rep((rows, emb)),                                         # positions (tiled)
        rep((alpha, emb)),                                        # token-embed weight
        per_layer((n_heads, emb, hd)),                            # W_q per head
        per_layer((n_heads, emb, hd)),                            # W_k per head
        per_layer((n_heads, emb, hd)),                            # W_v per head
        per_layer((1, emb)), per_layer((1, emb)),                 # ln0 w / b
        per_layer((1, emb)), per_layer((1, emb)),                 # ln1 w / b
        per_layer((emb, mlp_size)), per_layer((1, mlp_size)),     # mlp W1 / b1
        per_layer((mlp_size, emb)), per_layer((1, emb)),          # mlp W2 / b2
        rep((1, emb)), rep((1, emb)),                             # final LN w / b
        rep((emb, alpha_pad)), rep((1, alpha_pad)),               # unembedding W / b
    ]
    out_specs = pl.BlockSpec((bt, seq, alpha_pad), lambda b, l: (b, 0, 0))

    out = pl.pallas_call(
        decode_transformer_kernel,
        out_shape=jax.ShapeDtypeStruct((batch, seq, alpha_pad), jnp.float32),
        grid=(n_bb, n_layers),
        in_specs=in_specs,
        out_specs=out_specs,
        scratch_shapes=[pltpu.VMEM((rows, emb), jnp.float32),     # running x
                        pltpu.VMEM((rows, emb), jnp.float32)],    # per-layer attn out
        compiler_params=pltpu.CompilerParams(
            dimension_semantics=("parallel", "arbitrary"),
            vmem_limit_bytes=32 * 1024 * 1024),
    )(toks.astype(f32), pos, wtok_t, wq, wk, wv,
      params["ln0_w"], params["ln0_b"], params["ln1_w"], params["ln1_b"],
      w1_t, params["b1"], w2_t, params["b2"],
      params["lnf_w"], params["lnf_b"], wu_t, bu_p)
    return out[..., :alpha]


def init_params(key, *, T_max, V, E, M, L):
    ks = jax.random.split(key, 15)
    nrm = lambda k, s, sc=0.1: sc * jax.random.normal(k, s, jnp.float32)
    return dict(
        w_tok=nrm(ks[0], (E, V)),
        w_pos=nrm(ks[1], (E, T_max)),
        w_attn=nrm(ks[2], (L, 3 * E, E)),
        ln0_w=1.0 + nrm(ks[3], (L, 1, E)),
        ln0_b=nrm(ks[4], (L, 1, E)),
        ln1_w=1.0 + nrm(ks[5], (L, 1, E)),
        ln1_b=nrm(ks[6], (L, 1, E)),
        w1=nrm(ks[7], (L, M, E)),
        b1=nrm(ks[8], (L, 1, M)),
        w2=nrm(ks[9], (L, E, M)),
        b2=nrm(ks[10], (L, 1, E)),
        lnf_w=1.0 + nrm(ks[11], (1, E)),
        lnf_b=nrm(ks[12], (1, E)),
        w_unemb=nrm(ks[13], (V, E)),
        b_unemb=nrm(ks[14], (1, V)),
    )


def reference_forward(toks, params, *, num_heads, num_layers):
    """Pure-JAX mirror of the PyTorch forward (f32 HIGHEST), for correctness."""
    B, T, V = toks.shape
    E = params["w_tok"].shape[0]
    H, c = num_heads, E // num_heads
    ee = lambda *a, **k: jnp.einsum(*a, precision=lax.Precision.HIGHEST, **k)

    def ln(x, w, b):
        mu = x.mean(-1, keepdims=True)
        var = ((x - mu) ** 2).mean(-1, keepdims=True)
        return (x - mu) / jnp.sqrt(var + 1e-5) * w + b

    x = ee('btv,ev->bte', toks, params["w_tok"]) + params["w_pos"].T[:T, :]
    mask = jnp.where(jnp.tril(jnp.ones((T, T))) > 0, 0.0, -jnp.inf)
    for l in range(num_layers):
        x_in = x
        h = ln(x_in, params["ln0_w"][l, 0], params["ln0_b"][l, 0])
        qkv = ee('bte,fe->btf', h, params["w_attn"][l])
        qkv = qkv.reshape(B, T, H, 3 * c).transpose(0, 2, 1, 3)
        q, k, v = qkv[..., :c], qkv[..., c:2 * c], qkv[..., 2 * c:]
        a = ee('bhtc,bhsc->bhts', q, k) / (c ** 0.5) + mask
        p = jax.nn.softmax(a, axis=-1)
        y = ee('bhts,bhsc->bhtc', p, v).transpose(0, 2, 1, 3).reshape(B, T, E)
        a_res = x_in + y
        h2 = ln(a_res, params["ln1_w"][l, 0], params["ln1_b"][l, 0])
        m1 = jax.nn.relu(ee('bte,me->btm', h2, params["w1"][l]) + params["b1"][l, 0])
        mlp = ee('btm,em->bte', m1, params["w2"][l]) + params["b2"][l, 0]
        x = x_in + a_res + mlp
    hf = ln(x, params["lnf_w"][0], params["lnf_b"][0])
    return ee('bte,ve->btv', hf, params["w_unemb"]) + params["b_unemb"][0]


if __name__ == "__main__":
    B, T, T_max = 2, 8, 16
    V, E, M = 16, 32, 64          # alphabet, embed, mlp sizes
    H, L = 4, 2                   # heads, layers
    key = jax.random.PRNGKey(0)
    pkey, tkey = jax.random.split(key)
    params = init_params(pkey, T_max=T_max, V=V, E=E, M=M, L=L)

    # the module treats `toks` as dense (B, T, alphabet_size) features (e.g. one-hot)
    tok_ids = jax.random.randint(tkey, (B, T), 0, V)
    toks = jax.nn.one_hot(tok_ids, V, dtype=jnp.float32)

    out = decode_transformer(toks, params, num_heads=H, num_layers=L)
    out = jax.block_until_ready(out)

    ref = reference_forward(toks, params, num_heads=H, num_layers=L)
    assert out.shape == (B, T, V)
    err = float(jnp.max(jnp.abs(out - ref)))
    # bf16 MXU inputs + approx softmax reciprocal -> loosened tolerance vs f32 ref
    assert err < 5e-2, err
    print("KERNEL_OK")
</pallas_src>

<mosaic_0001>
module attributes {stable_mosaic.version = 11 : i64} {
  func.func @decode_transformer_kernel(%arg0: i32, %arg1: i32, %arg2: memref<2x8x16xf32, #tpu.memory_space<vmem>>, %arg3: memref<16x32xf32, #tpu.memory_space<vmem>>, %arg4: memref<16x32xbf16, #tpu.memory_space<vmem>>, %arg5: memref<1x4x32x8xbf16, #tpu.memory_space<vmem>>, %arg6: memref<1x4x32x8xbf16, #tpu.memory_space<vmem>>, %arg7: memref<1x4x32x8xbf16, #tpu.memory_space<vmem>>, %arg8: memref<1x1x32xf32, #tpu.memory_space<vmem>>, %arg9: memref<1x1x32xf32, #tpu.memory_space<vmem>>, %arg10: memref<1x1x32xf32, #tpu.memory_space<vmem>>, %arg11: memref<1x1x32xf32, #tpu.memory_space<vmem>>, %arg12: memref<1x32x64xbf16, #tpu.memory_space<vmem>>, %arg13: memref<1x1x64xf32, #tpu.memory_space<vmem>>, %arg14: memref<1x64x32xbf16, #tpu.memory_space<vmem>>, %arg15: memref<1x1x32xf32, #tpu.memory_space<vmem>>, %arg16: memref<1x32xf32, #tpu.memory_space<vmem>>, %arg17: memref<1x32xf32, #tpu.memory_space<vmem>>, %arg18: memref<32x128xbf16, #tpu.memory_space<vmem>>, %arg19: memref<1x128xf32, #tpu.memory_space<vmem>>, %arg20: memref<2x8x128xf32, #tpu.memory_space<vmem>>, %arg21: memref<16x32xf32, #tpu.memory_space<vmem>>, %arg22: memref<16x32xf32, #tpu.memory_space<vmem>>) attributes {dimension_semantics = [#tpu.dimension_semantics<parallel>, #tpu.dimension_semantics<arbitrary>], iteration_bounds = array<i64: 1, 2>, scalar_prefetch = 0 : i64, scratch_operands = 2 : i64, tpu.core_type = #tpu.core_type<tc>, window_params = [{transform_indices = @transform_0, window_bounds = array<i64: 2, 8, 16>}, {pipeline_mode = #tpu.pipeline_mode<synchronous>, transform_indices = @transform_1, window_bounds = array<i64: 16, 32>}, {pipeline_mode = #tpu.pipeline_mode<synchronous>, transform_indices = @transform_2, window_bounds = array<i64: 16, 32>}, {transform_indices = @transform_3, window_bounds = array<i64: 1, 4, 32, 8>}, {transform_indices = @transform_4, window_bounds = array<i64: 1, 4, 32, 8>}, {transform_indices = @transform_5, window_bounds = array<i64: 1, 4, 32, 8>}, {transform_indices = @transform_6, window_bounds = array<i64: 1, 1, 32>}, {transform_indices = @transform_7, window_bounds = array<i64: 1, 1, 32>}, {transform_indices = @transform_8, window_bounds = array<i64: 1, 1, 32>}, {transform_indices = @transform_9, window_bounds = array<i64: 1, 1, 32>}, {transform_indices = @transform_10, window_bounds = array<i64: 1, 32, 64>}, {transform_indices = @transform_11, window_bounds = array<i64: 1, 1, 64>}, {transform_indices = @transform_12, window_bounds = array<i64: 1, 64, 32>}, {transform_indices = @transform_13, window_bounds = array<i64: 1, 1, 32>}, {pipeline_mode = #tpu.pipeline_mode<synchronous>, transform_indices = @transform_14, window_bounds = array<i64: 1, 32>}, {pipeline_mode = #tpu.pipeline_mode<synchronous>, transform_indices = @transform_15, window_bounds = array<i64: 1, 32>}, {pipeline_mode = #tpu.pipeline_mode<synchronous>, transform_indices = @transform_16, window_bounds = array<i64: 32, 128>}, {pipeline_mode = #tpu.pipeline_mode<synchronous>, transform_indices = @transform_17, window_bounds = array<i64: 1, 128>}, {transform_indices = @transform_18, window_bounds = array<i64: 2, 8, 128>}]} {
    %c0_i32 = arith.constant 0 : i32
    %0 = arith.cmpi eq, %arg1, %c0_i32 : i32
    %1 = arith.extui %0 : i1 to i32
    %c0_i32_0 = arith.constant 0 : i32
    %2 = arith.cmpi ne, %1, %c0_i32_0 : i32
    scf.if %2 {
      %c0_129 = arith.constant 0 : index
      %c0_130 = arith.constant 0 : index
      %c0_131 = arith.constant 0 : index
      %214 = vector.load %arg2[%c0_129, %c0_130, %c0_131] : memref<2x8x16xf32, #tpu.memory_space<vmem>>, vector<2x8x16xf32>
      %215 = vector.shape_cast %214 : vector<2x8x16xf32> to vector<16x16xf32>
      %216 = arith.truncf %215 : vector<16x16xf32> to vector<16x16xbf16>
      %c0_132 = arith.constant 0 : index
      %c0_133 = arith.constant 0 : index
      %217 = vector.load %arg4[%c0_132, %c0_133] : memref<16x32xbf16, #tpu.memory_space<vmem>>, vector<16x32xbf16>
      %cst_134 = arith.constant dense<0.000000e+00> : vector<16x32xf32>
      %218 = tpu.matmul %216, %217, %cst_134 {dimension_numbers = #tpu.dot_dimension_numbers<[1], [0], [0], [1], [0, 0, 1, 1], [], []>} : vector<16x16xbf16>, vector<16x32xbf16>, vector<16x32xf32> -> vector<16x32xf32>
      %c0_135 = arith.constant 0 : index
      %c0_136 = arith.constant 0 : index
      %219 = vector.load %arg3[%c0_135, %c0_136] : memref<16x32xf32, #tpu.memory_space<vmem>>, vector<16x32xf32>
      %220 = arith.addf %218, %219 : vector<16x32xf32>
      %c0_137 = arith.constant 0 : index
      %c0_138 = arith.constant 0 : index
      %221 = vector.load %arg21[%c0_137, %c0_138] : memref<16x32xf32, #tpu.memory_space<vmem>>, vector<16x32xf32>
      tpu.vector_store %arg21[%c0_137, %c0_138], %220 {strides = array<i32>} : memref<16x32xf32, #tpu.memory_space<vmem>>, vector<16x32xf32>,
    } else {
    }
    %c0 = arith.constant 0 : index
    %c0_1 = arith.constant 0 : index
    %3 = vector.load %arg21[%c0, %c0_1] : memref<16x32xf32, #tpu.memory_space<vmem>>, vector<16x32xf32>
    %c0_2 = arith.constant 0 : index
    %c0_3 = arith.constant 0 : index
    %c0_4 = arith.constant 0 : index
    %4 = vector.load %arg8[%c0_2, %c0_3, %c0_4] : memref<1x1x32xf32, #tpu.memory_space<vmem>>, vector<1x1x32xf32>
    %5 = vector.shape_cast %4 : vector<1x1x32xf32> to vector<1x32xf32>
    %c0_5 = arith.constant 0 : index
    %c0_6 = arith.constant 0 : index
    %c0_7 = arith.constant 0 : index
    %6 = vector.load %arg9[%c0_5, %c0_6, %c0_7] : memref<1x1x32xf32, #tpu.memory_space<vmem>>, vector<1x1x32xf32>
    %7 = vector.shape_cast %6 : vector<1x1x32xf32> to vector<1x32xf32>
    %cst = arith.constant dense<0.000000e+00> : vector<16xf32>
    %8 = vector.multi_reduction <add>, %3, %cst [1] : vector<16x32xf32> to vector<16xf32>
    %9 = vector.shape_cast %8 : vector<16xf32> to vector<16x1xf32>
    %cst_8 = arith.constant 3.200000e+01 : f32
    %10 = vector.broadcast %cst_8 : f32 to vector<16x1xf32>
    %11 = arith.divf %9, %10 : vector<16x1xf32>
    %12 = vector.broadcast %11 : vector<16x1xf32> to vector<16x32xf32>
    %13 = arith.subf %3, %12 : vector<16x32xf32>
    %14 = arith.mulf %13, %13 : vector<16x32xf32>
    %cst_9 = arith.constant dense<0.000000e+00> : vector<16xf32>
    %15 = vector.multi_reduction <add>, %14, %cst_9 [1] : vector<16x32xf32> to vector<16xf32>
    %16 = vector.shape_cast %15 : vector<16xf32> to vector<16x1xf32>
    %cst_10 = arith.constant 3.200000e+01 : f32
    %17 = vector.broadcast %cst_10 : f32 to vector<16x1xf32>
    %18 = arith.divf %16, %17 : vector<16x1xf32>
    %19 = vector.broadcast %11 : vector<16x1xf32> to vector<16x32xf32>
    %20 = arith.subf %3, %19 : vector<16x32xf32>
    %cst_11 = arith.constant 9.99999974E-6 : f32
    %21 = vector.broadcast %cst_11 : f32 to vector<16x1xf32>
    %22 = arith.addf %18, %21 : vector<16x1xf32>
    %23 = math.rsqrt %22 : vector<16x1xf32>
    %24 = vector.broadcast %23 : vector<16x1xf32> to vector<16x32xf32>
    %25 = arith.mulf %20, %24 : vector<16x32xf32>
    %26 = vector.broadcast %5 : vector<1x32xf32> to vector<16x32xf32>
    %27 = arith.mulf %25, %26 : vector<16x32xf32>
    %28 = vector.broadcast %7 : vector<1x32xf32> to vector<16x32xf32>
    %29 = arith.addf %27, %28 : vector<16x32xf32>
    %30 = arith.truncf %29 : vector<16x32xf32> to vector<16x32xbf16>
    %31 = tpu.iota {dimensions = array<i32: 0>} : vector<8x8xi32>
    %32 = tpu.iota {dimensions = array<i32: 1>} : vector<8x8xi32>
    %33 = arith.cmpi sle, %32, %31 : vector<8x8xi32>
    %c0_12 = arith.constant 0 : index
    %c0_13 = arith.constant 0 : index
    %c0_14 = arith.constant 0 : index
    %c0_15 = arith.constant 0 : index
    %34 = vector.load %arg5[%c0_12, %c0_13, %c0_14, %c0_15] : memref<1x4x32x8xbf16, #tpu.memory_space<vmem>>, vector<1x1x32x8xbf16>
    %35 = vector.shape_cast %34 : vector<1x1x32x8xbf16> to vector<32x8xbf16>
    %cst_16 = arith.constant dense<0.000000e+00> : vector<16x8xf32>
    %36 = tpu.matmul %30, %35, %cst_16 {dimension_numbers = #tpu.dot_dimension_numbers<[1], [0], [0], [1], [0, 0, 1, 1], [], []>} : vector<16x32xbf16>, vector<32x8xbf16>, vector<16x8xf32> -> vector<16x8xf32>
    %cst_17 = arith.constant 0.353553385 : f32
    %37 = vector.broadcast %cst_17 : f32 to vector<16x8xf32>
    %38 = arith.mulf %36, %37 : vector<16x8xf32>
    %39 = vector.shape_cast %38 : vector<16x8xf32> to vector<2x8x8xf32>
    %c0_18 = arith.constant 0 : index
    %c0_19 = arith.constant 0 : index
    %c0_20 = arith.constant 0 : index
    %c0_21 = arith.constant 0 : index
    %40 = vector.load %arg6[%c0_18, %c0_19, %c0_20, %c0_21] : memref<1x4x32x8xbf16, #tpu.memory_space<vmem>>, vector<1x1x32x8xbf16>
    %41 = vector.shape_cast %40 : vector<1x1x32x8xbf16> to vector<32x8xbf16>
    %cst_22 = arith.constant dense<0.000000e+00> : vector<16x8xf32>
    %42 = tpu.matmul %30, %41, %cst_22 {dimension_numbers = #tpu.dot_dimension_numbers<[1], [0], [0], [1], [0, 0, 1, 1], [], []>} : vector<16x32xbf16>, vector<32x8xbf16>, vector<16x8xf32> -> vector<16x8xf32>
    %43 = vector.shape_cast %42 : vector<16x8xf32> to vector<2x8x8xf32>
    %c0_23 = arith.constant 0 : index
    %c0_24 = arith.constant 0 : index
    %c0_25 = arith.constant 0 : index
    %c0_26 = arith.constant 0 : index
    %44 = vector.load %arg7[%c0_23, %c0_24, %c0_25, %c0_26] : memref<1x4x32x8xbf16, #tpu.memory_space<vmem>>, vector<1x1x32x8xbf16>
    %45 = vector.shape_cast %44 : vector<1x1x32x8xbf16> to vector<32x8xbf16>
    %cst_27 = arith.constant dense<0.000000e+00> : vector<16x8xf32>
    %46 = tpu.matmul %30, %45, %cst_27 {dimension_numbers = #tpu.dot_dimension_numbers<[1], [0], [0], [1], [0, 0, 1, 1], [], []>} : vector<16x32xbf16>, vector<32x8xbf16>, vector<16x8xf32> -> vector<16x8xf32>
    %47 = vector.shape_cast %46 : vector<16x8xf32> to vector<2x8x8xf32>
    "tpu.trace_start"() <{level = 10 : i32, message = "btc,bsc->bts"}> : () -> ()
    %cst_28 = arith.constant dense<0.000000e+00> : vector<2x8x8xf32>
    %48 = tpu.matmul %39, %43, %cst_28 {dimension_numbers = #tpu.dot_dimension_numbers<[2], [2], [1], [1], [0, 0, 0, 1, 1, 1], [0], [0]>} : vector<2x8x8xf32>, vector<2x8x8xf32>, vector<2x8x8xf32> -> vector<2x8x8xf32>
    %cst_29 = arith.constant 0xFF800000 : f32
    "tpu.trace_stop"() : () -> ()
    %49 = vector.shape_cast %33 : vector<8x8xi1> to vector<1x8x8xi1>
    %50 = vector.broadcast %49 : vector<1x8x8xi1> to vector<2x8x8xi1>
    %51 = vector.broadcast %cst_29 : f32 to vector<2x8x8xf32>
    %52 = arith.select %50, %48, %51 : vector<2x8x8xi1>, vector<2x8x8xf32>
    %cst_30 = arith.constant dense<0xFF800000> : vector<2x8xf32>
    %53 = vector.multi_reduction <maximumf>, %52, %cst_30 [2] : vector<2x8x8xf32> to vector<2x8xf32>
    %54 = vector.shape_cast %53 : vector<2x8xf32> to vector<2x8x1xf32>
    %55 = vector.broadcast %54 : vector<2x8x1xf32> to vector<2x8x8xf32>
    %56 = arith.subf %52, %55 : vector<2x8x8xf32>
    %57 = math.exp %56 : vector<2x8x8xf32>
    %cst_31 = arith.constant dense<0.000000e+00> : vector<2x8xf32>
    %58 = vector.multi_reduction <add>, %57, %cst_31 [2] : vector<2x8x8xf32> to vector<2x8xf32>
    %59 = vector.shape_cast %58 : vector<2x8xf32> to vector<2x8x1xf32>
    %60 = tpu.reciprocal %59 {approx = true} : vector<2x8x1xf32> -> vector<2x8x1xf32>
    %61 = vector.broadcast %60 : vector<2x8x1xf32> to vector<2x8x8xf32>
    %62 = arith.mulf %57, %61 : vector<2x8x8xf32>
    "tpu.trace_start"() <{level = 10 : i32, message = "bts,bsc->btc"}> : () -> ()
    %cst_32 = arith.constant dense<0.000000e+00> : vector<2x8x8xf32>
    %63 = tpu.matmul %62, %47, %cst_32 {dimension_numbers = #tpu.dot_dimension_numbers<[2], [1], [1], [2], [0, 0, 0, 1, 1, 2], [0], [0]>} : vector<2x8x8xf32>, vector<2x8x8xf32>, vector<2x8x8xf32> -> vector<2x8x8xf32>
    "tpu.trace_stop"() : () -> ()
    %64 = vector.shape_cast %63 : vector<2x8x8xf32> to vector<16x8xf32>
    %c0_33 = arith.constant 0 : index
    %c0_34 = arith.constant 0 : index
    %65 = vector.load %arg22[%c0_33, %c0_34] : memref<16x32xf32, #tpu.memory_space<vmem>>, vector<16x8xf32>
    tpu.vector_store %arg22[%c0_33, %c0_34], %64 {strides = array<i32>} : memref<16x32xf32, #tpu.memory_space<vmem>>, vector<16x8xf32>,
    %c0_35 = arith.constant 0 : index
    %c1 = arith.constant 1 : index
    %c0_36 = arith.constant 0 : index
    %c0_37 = arith.constant 0 : index
    %66 = vector.load %arg5[%c0_35, %c1, %c0_36, %c0_37] : memref<1x4x32x8xbf16, #tpu.memory_space<vmem>>, vector<1x1x32x8xbf16>
    %67 = vector.shape_cast %66 : vector<1x1x32x8xbf16> to vector<32x8xbf16>
    %cst_38 = arith.constant dense<0.000000e+00> : vector<16x8xf32>
    %68 = tpu.matmul %30, %67, %cst_38 {dimension_numbers = #tpu.dot_dimension_numbers<[1], [0], [0], [1], [0, 0, 1, 1], [], []>} : vector<16x32xbf16>, vector<32x8xbf16>, vector<16x8xf32> -> vector<16x8xf32>
    %cst_39 = arith.constant 0.353553385 : f32
    %69 = vector.broadcast %cst_39 : f32 to vector<16x8xf32>
    %70 = arith.mulf %68, %69 : vector<16x8xf32>
    %71 = vector.shape_cast %70 : vector<16x8xf32> to vector<2x8x8xf32>
    %c0_40 = arith.constant 0 : index
    %c1_41 = arith.constant 1 : index
    %c0_42 = arith.constant 0 : index
    %c0_43 = arith.constant 0 : index
    %72 = vector.load %arg6[%c0_40, %c1_41, %c0_42, %c0_43] : memref<1x4x32x8xbf16, #tpu.memory_space<vmem>>, vector<1x1x32x8xbf16>
    %73 = vector.shape_cast %72 : vector<1x1x32x8xbf16> to vector<32x8xbf16>
    %cst_44 = arith.constant dense<0.000000e+00> : vector<16x8xf32>
    %74 = tpu.matmul %30, %73, %cst_44 {dimension_numbers = #tpu.dot_dimension_numbers<[1], [0], [0], [1], [0, 0, 1, 1], [], []>} : vector<16x32xbf16>, vector<32x8xbf16>, vector<16x8xf32> -> vector<16x8xf32>
    %75 = vector.shape_cast %74 : vector<16x8xf32> to vector<2x8x8xf32>
    %c0_45 = arith.constant 0 : index
    %c1_46 = arith.constant 1 : index
    %c0_47 = arith.constant 0 : index
    %c0_48 = arith.constant 0 : index
    %76 = vector.load %arg7[%c0_45, %c1_46, %c0_47, %c0_48] : memref<1x4x32x8xbf16, #tpu.memory_space<vmem>>, vector<1x1x32x8xbf16>
    %77 = vector.shape_cast %76 : vector<1x1x32x8xbf16> to vector<32x8xbf16>
    %cst_49 = arith.constant dense<0.000000e+00> : vector<16x8xf32>
    %78 = tpu.matmul %30, %77, %cst_49 {dimension_numbers = #tpu.dot_dimension_numbers<[1], [0], [0], [1], [0, 0, 1, 1], [], []>} : vector<16x32xbf16>, vector<32x8xbf16>, vector<16x8xf32> -> vector<16x8xf32>
    %79 = vector.shape_cast %78 : vector<16x8xf32> to vector<2x8x8xf32>
    "tpu.trace_start"() <{level = 10 : i32, message = "btc,bsc->bts"}> : () -> ()
    %cst_50 = arith.constant dense<0.000000e+00> : vector<2x8x8xf32>
    %80 = tpu.matmul %71, %75, %cst_50 {dimension_numbers = #tpu.dot_dimension_numbers<[2], [2], [1], [1], [0, 0, 0, 1, 1, 1], [0], [0]>} : vector<2x8x8xf32>, vector<2x8x8xf32>, vector<2x8x8xf32> -> vector<2x8x8xf32>
    %cst_51 = arith.constant 0xFF800000 : f32
    "tpu.trace_stop"() : () -> ()
    %81 = vector.shape_cast %33 : vector<8x8xi1> to vector<1x8x8xi1>
    %82 = vector.broadcast %81 : vector<1x8x8xi1> to vector<2x8x8xi1>
    %83 = vector.broadcast %cst_51 : f32 to vector<2x8x8xf32>
    %84 = arith.select %82, %80, %83 : vector<2x8x8xi1>, vector<2x8x8xf32>
    %cst_52 = arith.constant dense<0xFF800000> : vector<2x8xf32>
    %85 = vector.multi_reduction <maximumf>, %84, %cst_52 [2] : vector<2x8x8xf32> to vector<2x8xf32>
    %86 = vector.shape_cast %85 : vector<2x8xf32> to vector<2x8x1xf32>
    %87 = vector.broadcast %86 : vector<2x8x1xf32> to vector<2x8x8xf32>
    %88 = arith.subf %84, %87 : vector<2x8x8xf32>
    %89 = math.exp %88 : vector<2x8x8xf32>
    %cst_53 = arith.constant dense<0.000000e+00> : vector<2x8xf32>
    %90 = vector.multi_reduction <add>, %89, %cst_53 [2] : vector<2x8x8xf32> to vector<2x8xf32>
    %91 = vector.shape_cast %90 : vector<2x8xf32> to vector<2x8x1xf32>
    %92 = tpu.reciprocal %91 {approx = true} : vector<2x8x1xf32> -> vector<2x8x1xf32>
    %93 = vector.broadcast %92 : vector<2x8x1xf32> to vector<2x8x8xf32>
    %94 = arith.mulf %89, %93 : vector<2x8x8xf32>
    "tpu.trace_start"() <{level = 10 : i32, message = "bts,bsc->btc"}> : () -> ()
    %cst_54 = arith.constant dense<0.000000e+00> : vector<2x8x8xf32>
    %95 = tpu.matmul %94, %79, %cst_54 {dimension_numbers = #tpu.dot_dimension_numbers<[2], [1], [1], [2], [0, 0, 0, 1, 1, 2], [0], [0]>} : vector<2x8x8xf32>, vector<2x8x8xf32>, vector<2x8x8xf32> -> vector<2x8x8xf32>
    "tpu.trace_stop"() : () -> ()
    %96 = vector.shape_cast %95 : vector<2x8x8xf32> to vector<16x8xf32>
    %c0_55 = arith.constant 0 : index
    %c8 = arith.constant 8 : index
    %97 = vector.load %arg22[%c0_55, %c8] : memref<16x32xf32, #tpu.memory_space<vmem>>, vector<16x8xf32>
    tpu.vector_store %arg22[%c0_55, %c8], %96 {strides = array<i32>} : memref<16x32xf32, #tpu.memory_space<vmem>>, vector<16x8xf32>,
    %c0_56 = arith.constant 0 : index
    %c2 = arith.constant 2 : index
    %c0_57 = arith.constant 0 : index
    %c0_58 = arith.constant 0 : index
    %98 = vector.load %arg5[%c0_56, %c2, %c0_57, %c0_58] : memref<1x4x32x8xbf16, #tpu.memory_space<vmem>>, vector<1x1x32x8xbf16>
    %99 = vector.shape_cast %98 : vector<1x1x32x8xbf16> to vector<32x8xbf16>
    %cst_59 = arith.constant dense<0.000000e+00> : vector<16x8xf32>
    %100 = tpu.matmul %30, %99, %cst_59 {dimension_numbers = #tpu.dot_dimension_numbers<[1], [0], [0], [1], [0, 0, 1, 1], [], []>} : vector<16x32xbf16>, vector<32x8xbf16>, vector<16x8xf32> -> vector<16x8xf32>
    %cst_60 = arith.constant 0.353553385 : f32
    %101 = vector.broadcast %cst_60 : f32 to vector<16x8xf32>
    %102 = arith.mulf %100, %101 : vector<16x8xf32>
    %103 = vector.shape_cast %102 : vector<16x8xf32> to vector<2x8x8xf32>
    %c0_61 = arith.constant 0 : index
    %c2_62 = arith.constant 2 : index
    %c0_63 = arith.constant 0 : index
    %c0_64 = arith.constant 0 : index
    %104 = vector.load %arg6[%c0_61, %c2_62, %c0_63, %c0_64] : memref<1x4x32x8xbf16, #tpu.memory_space<vmem>>, vector<1x1x32x8xbf16>
    %105 = vector.shape_cast %104 : vector<1x1x32x8xbf16> to vector<32x8xbf16>
    %cst_65 = arith.constant dense<0.000000e+00> : vector<16x8xf32>
    %106 = tpu.matmul %30, %105, %cst_65 {dimension_numbers = #tpu.dot_dimension_numbers<[1], [0], [0], [1], [0, 0, 1, 1], [], []>} : vector<16x32xbf16>, vector<32x8xbf16>, vector<16x8xf32> -> vector<16x8xf32>
    %107 = vector.shape_cast %106 : vector<16x8xf32> to vector<2x8x8xf32>
    %c0_66 = arith.constant 0 : index
    %c2_67 = arith.constant 2 : index
    %c0_68 = arith.constant 0 : index
    %c0_69 = arith.constant 0 : index
    %108 = vector.load %arg7[%c0_66, %c2_67, %c0_68, %c0_69] : memref<1x4x32x8xbf16, #tpu.memory_space<vmem>>, vector<1x1x32x8xbf16>
    %109 = vector.shape_cast %108 : vector<1x1x32x8xbf16> to vector<32x8xbf16>
    %cst_70 = arith.constant dense<0.000000e+00> : vector<16x8xf32>
    %110 = tpu.matmul %30, %109, %cst_70 {dimension_numbers = #tpu.dot_dimension_numbers<[1], [0], [0], [1], [0, 0, 1, 1], [], []>} : vector<16x32xbf16>, vector<32x8xbf16>, vector<16x8xf32> -> vector<16x8xf32>
    %111 = vector.shape_cast %110 : vector<16x8xf32> to vector<2x8x8xf32>
    "tpu.trace_start"() <{level = 10 : i32, message = "btc,bsc->bts"}> : () -> ()
    %cst_71 = arith.constant dense<0.000000e+00> : vector<2x8x8xf32>
    %112 = tpu.matmul %103, %107, %cst_71 {dimension_numbers = #tpu.dot_dimension_numbers<[2], [2], [1], [1], [0, 0, 0, 1, 1, 1], [0], [0]>} : vector<2x8x8xf32>, vector<2x8x8xf32>, vector<2x8x8xf32> -> vector<2x8x8xf32>
    %cst_72 = arith.constant 0xFF800000 : f32
    "tpu.trace_stop"() : () -> ()
    %113 = vector.shape_cast %33 : vector<8x8xi1> to vector<1x8x8xi1>
    %114 = vector.broadcast %113 : vector<1x8x8xi1> to vector<2x8x8xi1>
    %115 = vector.broadcast %cst_72 : f32 to vector<2x8x8xf32>
    %116 = arith.select %114, %112, %115 : vector<2x8x8xi1>, vector<2x8x8xf32>
    %cst_73 = arith.constant dense<0xFF800000> : vector<2x8xf32>
    %117 = vector.multi_reduction <maximumf>, %116, %cst_73 [2] : vector<2x8x8xf32> to vector<2x8xf32>
    %118 = vector.shape_cast %117 : vector<2x8xf32> to vector<2x8x1xf32>
    %119 = vector.broadcast %118 : vector<2x8x1xf32> to vector<2x8x8xf32>
    %120 = arith.subf %116, %119 : vector<2x8x8xf32>
    %121 = math.exp %120 : vector<2x8x8xf32>
    %cst_74 = arith.constant dense<0.000000e+00> : vector<2x8xf32>
    %122 = vector.multi_reduction <add>, %121, %cst_74 [2] : vector<2x8x8xf32> to vector<2x8xf32>
    %123 = vector.shape_cast %122 : vector<2x8xf32> to vector<2x8x1xf32>
    %124 = tpu.reciprocal %123 {approx = true} : vector<2x8x1xf32> -> vector<2x8x1xf32>
    %125 = vector.broadcast %124 : vector<2x8x1xf32> to vector<2x8x8xf32>
    %126 = arith.mulf %121, %125 : vector<2x8x8xf32>
    "tpu.trace_start"() <{level = 10 : i32, message = "bts,bsc->btc"}> : () -> ()
    %cst_75 = arith.constant dense<0.000000e+00> : vector<2x8x8xf32>
    %127 = tpu.matmul %126, %111, %cst_75 {dimension_numbers = #tpu.dot_dimension_numbers<[2], [1], [1], [2], [0, 0, 0, 1, 1, 2], [0], [0]>} : vector<2x8x8xf32>, vector<2x8x8xf32>, vector<2x8x8xf32> -> vector<2x8x8xf32>
    "tpu.trace_stop"() : () -> ()
    %128 = vector.shape_cast %127 : vector<2x8x8xf32> to vector<16x8xf32>
    %c0_76 = arith.constant 0 : index
    %c16 = arith.constant 16 : index
    %129 = vector.load %arg22[%c0_76, %c16] : memref<16x32xf32, #tpu.memory_space<vmem>>, vector<16x8xf32>
    tpu.vector_store %arg22[%c0_76, %c16], %128 {strides = array<i32>} : memref<16x32xf32, #tpu.memory_space<vmem>>, vector<16x8xf32>,
    %c0_77 = arith.constant 0 : index
    %c3 = arith.constant 3 : index
    %c0_78 = arith.constant 0 : index
    %c0_79 = arith.constant 0 : index
    %130 = vector.load %arg5[%c0_77, %c3, %c0_78, %c0_79] : memref<1x4x32x8xbf16, #tpu.memory_space<vmem>>, vector<1x1x32x8xbf16>
    %131 = vector.shape_cast %130 : vector<1x1x32x8xbf16> to vector<32x8xbf16>
    %cst_80 = arith.constant dense<0.000000e+00> : vector<16x8xf32>
    %132 = tpu.matmul %30, %131, %cst_80 {dimension_numbers = #tpu.dot_dimension_numbers<[1], [0], [0], [1], [0, 0, 1, 1], [], []>} : vector<16x32xbf16>, vector<32x8xbf16>, vector<16x8xf32> -> vector<16x8xf32>
    %cst_81 = arith.constant 0.353553385 : f32
    %133 = vector.broadcast %cst_81 : f32 to vector<16x8xf32>
    %134 = arith.mulf %132, %133 : vector<16x8xf32>
    %135 = vector.shape_cast %134 : vector<16x8xf32> to vector<2x8x8xf32>
    %c0_82 = arith.constant 0 : index
    %c3_83 = arith.constant 3 : index
    %c0_84 = arith.constant 0 : index
    %c0_85 = arith.constant 0 : index
    %136 = vector.load %arg6[%c0_82, %c3_83, %c0_84, %c0_85] : memref<1x4x32x8xbf16, #tpu.memory_space<vmem>>, vector<1x1x32x8xbf16>
    %137 = vector.shape_cast %136 : vector<1x1x32x8xbf16> to vector<32x8xbf16>
    %cst_86 = arith.constant dense<0.000000e+00> : vector<16x8xf32>
    %138 = tpu.matmul %30, %137, %cst_86 {dimension_numbers = #tpu.dot_dimension_numbers<[1], [0], [0], [1], [0, 0, 1, 1], [], []>} : vector<16x32xbf16>, vector<32x8xbf16>, vector<16x8xf32> -> vector<16x8xf32>
    %139 = vector.shape_cast %138 : vector<16x8xf32> to vector<2x8x8xf32>
    %c0_87 = arith.constant 0 : index
    %c3_88 = arith.constant 3 : index
    %c0_89 = arith.constant 0 : index
    %c0_90 = arith.constant 0 : index
    %140 = vector.load %arg7[%c0_87, %c3_88, %c0_89, %c0_90] : memref<1x4x32x8xbf16, #tpu.memory_space<vmem>>, vector<1x1x32x8xbf16>
    %141 = vector.shape_cast %140 : vector<1x1x32x8xbf16> to vector<32x8xbf16>
    %cst_91 = arith.constant dense<0.000000e+00> : vector<16x8xf32>
    %142 = tpu.matmul %30, %141, %cst_91 {dimension_numbers = #tpu.dot_dimension_numbers<[1], [0], [0], [1], [0, 0, 1, 1], [], []>} : vector<16x32xbf16>, vector<32x8xbf16>, vector<16x8xf32> -> vector<16x8xf32>
    %143 = vector.shape_cast %142 : vector<16x8xf32> to vector<2x8x8xf32>
    "tpu.trace_start"() <{level = 10 : i32, message = "btc,bsc->bts"}> : () -> ()
    %cst_92 = arith.constant dense<0.000000e+00> : vector<2x8x8xf32>
    %144 = tpu.matmul %135, %139, %cst_92 {dimension_numbers = #tpu.dot_dimension_numbers<[2], [2], [1], [1], [0, 0, 0, 1, 1, 1], [0], [0]>} : vector<2x8x8xf32>, vector<2x8x8xf32>, vector<2x8x8xf32> -> vector<2x8x8xf32>
    %cst_93 = arith.constant 0xFF800000 : f32
    "tpu.trace_stop"() : () -> ()
    %145 = vector.shape_cast %33 : vector<8x8xi1> to vector<1x8x8xi1>
    %146 = vector.broadcast %145 : vector<1x8x8xi1> to vector<2x8x8xi1>
    %147 = vector.broadcast %cst_93 : f32 to vector<2x8x8xf32>
    %148 = arith.select %146, %144, %147 : vector<2x8x8xi1>, vector<2x8x8xf32>
    %cst_94 = arith.constant dense<0xFF800000> : vector<2x8xf32>
    %149 = vector.multi_reduction <maximumf>, %148, %cst_94 [2] : vector<2x8x8xf32> to vector<2x8xf32>
    %150 = vector.shape_cast %149 : vector<2x8xf32> to vector<2x8x1xf32>
    %151 = vector.broadcast %150 : vector<2x8x1xf32> to vector<2x8x8xf32>
    %152 = arith.subf %148, %151 : vector<2x8x8xf32>
    %153 = math.exp %152 : vector<2x8x8xf32>
    %cst_95 = arith.constant dense<0.000000e+00> : vector<2x8xf32>
    %154 = vector.multi_reduction <add>, %153, %cst_95 [2] : vector<2x8x8xf32> to vector<2x8xf32>
    %155 = vector.shape_cast %154 : vector<2x8xf32> to vector<2x8x1xf32>
    %156 = tpu.reciprocal %155 {approx = true} : vector<2x8x1xf32> -> vector<2x8x1xf32>
    %157 = vector.broadcast %156 : vector<2x8x1xf32> to vector<2x8x8xf32>
    %158 = arith.mulf %153, %157 : vector<2x8x8xf32>
    "tpu.trace_start"() <{level = 10 : i32, message = "bts,bsc->btc"}> : () -> ()
    %cst_96 = arith.constant dense<0.000000e+00> : vector<2x8x8xf32>
    %159 = tpu.matmul %158, %143, %cst_96 {dimension_numbers = #tpu.dot_dimension_numbers<[2], [1], [1], [2], [0, 0, 0, 1, 1, 2], [0], [0]>} : vector<2x8x8xf32>, vector<2x8x8xf32>, vector<2x8x8xf32> -> vector<2x8x8xf32>
    "tpu.trace_stop"() : () -> ()
    %160 = vector.shape_cast %159 : vector<2x8x8xf32> to vector<16x8xf32>
    %c0_97 = arith.constant 0 : index
    %c24 = arith.constant 24 : index
    %161 = vector.load %arg22[%c0_97, %c24] : memref<16x32xf32, #tpu.memory_space<vmem>>, vector<16x8xf32>
    tpu.vector_store %arg22[%c0_97, %c24], %160 {strides = array<i32>} : memref<16x32xf32, #tpu.memory_space<vmem>>, vector<16x8xf32>,
    %c0_98 = arith.constant 0 : index
    %c0_99 = arith.constant 0 : index
    %162 = vector.load %arg22[%c0_98, %c0_99] : memref<16x32xf32, #tpu.memory_space<vmem>>, vector<16x32xf32>
    %163 = arith.addf %3, %162 : vector<16x32xf32>
    %c0_100 = arith.constant 0 : index
    %c0_101 = arith.constant 0 : index
    %c0_102 = arith.constant 0 : index
    %164 = vector.load %arg10[%c0_100, %c0_101, %c0_102] : memref<1x1x32xf32, #tpu.memory_space<vmem>>, vector<1x1x32xf32>
    %165 = vector.shape_cast %164 : vector<1x1x32xf32> to vector<1x32xf32>
    %c0_103 = arith.constant 0 : index
    %c0_104 = arith.constant 0 : index
    %c0_105 = arith.constant 0 : index
    %166 = vector.load %arg11[%c0_103, %c0_104, %c0_105] : memref<1x1x32xf32, #tpu.memory_space<vmem>>, vector<1x1x32xf32>
    %167 = vector.shape_cast %166 : vector<1x1x32xf32> to vector<1x32xf32>
    %cst_106 = arith.constant dense<0.000000e+00> : vector<16xf32>
    %168 = vector.multi_reduction <add>, %163, %cst_106 [1] : vector<16x32xf32> to vector<16xf32>
    %169 = vector.shape_cast %168 : vector<16xf32> to vector<16x1xf32>
    %cst_107 = arith.constant 3.200000e+01 : f32
    %170 = vector.broadcast %cst_107 : f32 to vector<16x1xf32>
    %171 = arith.divf %169, %170 : vector<16x1xf32>
    %172 = vector.broadcast %171 : vector<16x1xf32> to vector<16x32xf32>
    %173 = arith.subf %163, %172 : vector<16x32xf32>
    %174 = arith.mulf %173, %173 : vector<16x32xf32>
    %cst_108 = arith.constant dense<0.000000e+00> : vector<16xf32>
    %175 = vector.multi_reduction <add>, %174, %cst_108 [1] : vector<16x32xf32> to vector<16xf32>
    %176 = vector.shape_cast %175 : vector<16xf32> to vector<16x1xf32>
    %cst_109 = arith.constant 3.200000e+01 : f32
    %177 = vector.broadcast %cst_109 : f32 to vector<16x1xf32>
    %178 = arith.divf %176, %177 : vector<16x1xf32>
    %179 = vector.broadcast %171 : vector<16x1xf32> to vector<16x32xf32>
    %180 = arith.subf %163, %179 : vector<16x32xf32>
    %cst_110 = arith.constant 9.99999974E-6 : f32
    %181 = vector.broadcast %cst_110 : f32 to vector<16x1xf32>
    %182 = arith.addf %178, %181 : vector<16x1xf32>
    %183 = math.rsqrt %182 : vector<16x1xf32>
    %184 = vector.broadcast %183 : vector<16x1xf32> to vector<16x32xf32>
    %185 = arith.mulf %180, %184 : vector<16x32xf32>
    %186 = vector.broadcast %165 : vector<1x32xf32> to vector<16x32xf32>
    %187 = arith.mulf %185, %186 : vector<16x32xf32>
    %188 = vector.broadcast %167 : vector<1x32xf32> to vector<16x32xf32>
    %189 = arith.addf %187, %188 : vector<16x32xf32>
    %190 = arith.truncf %189 : vector<16x32xf32> to vector<16x32xbf16>
    %c0_111 = arith.constant 0 : index
    %c0_112 = arith.constant 0 : index
    %c0_113 = arith.constant 0 : index
    %191 = vector.load %arg12[%c0_111, %c0_112, %c0_113] : memref<1x32x64xbf16, #tpu.memory_space<vmem>>, vector<1x32x64xbf16>
    %192 = vector.shape_cast %191 : vector<1x32x64xbf16> to vector<32x64xbf16>
    %cst_114 = arith.constant dense<0.000000e+00> : vector<16x64xf32>
    %193 = tpu.matmul %190, %192, %cst_114 {dimension_numbers = #tpu.dot_dimension_numbers<[1], [0], [0], [1], [0, 0, 1, 1], [], []>} : vector<16x32xbf16>, vector<32x64xbf16>, vector<16x64xf32> -> vector<16x64xf32>
    %c0_115 = arith.constant 0 : index
    %c0_116 = arith.constant 0 : index
    %c0_117 = arith.constant 0 : index
    %194 = vector.load %arg13[%c0_115, %c0_116, %c0_117] : memref<1x1x64xf32, #tpu.memory_space<vmem>>, vector<1x1x64xf32>
    %195 = vector.shape_cast %194 : vector<1x1x64xf32> to vector<1x64xf32>
    %196 = vector.broadcast %195 : vector<1x64xf32> to vector<16x64xf32>
    %197 = arith.addf %193, %196 : vector<16x64xf32>
    %cst_118 = arith.constant 0.000000e+00 : f32
    %198 = vector.broadcast %cst_118 : f32 to vector<16x64xf32>
    %199 = arith.maximumf %197, %198 : vector<16x64xf32>
    %200 = arith.truncf %199 : vector<16x64xf32> to vector<16x64xbf16>
    %c0_119 = arith.constant 0 : index
    %c0_120 = arith.constant 0 : index
    %c0_121 = arith.constant 0 : index
    %201 = vector.load %arg14[%c0_119, %c0_120, %c0_121] : memref<1x64x32xbf16, #tpu.memory_space<vmem>>, vector<1x64x32xbf16>
    %202 = vector.shape_cast %201 : vector<1x64x32xbf16> to vector<64x32xbf16>
    %cst_122 = arith.constant dense<0.000000e+00> : vector<16x32xf32>
    %203 = tpu.matmul %200, %202, %cst_122 {dimension_numbers = #tpu.dot_dimension_numbers<[1], [0], [0], [1], [0, 0, 1, 1], [], []>} : vector<16x64xbf16>, vector<64x32xbf16>, vector<16x32xf32> -> vector<16x32xf32>
    %c0_123 = arith.constant 0 : index
    %c0_124 = arith.constant 0 : index
    %c0_125 = arith.constant 0 : index
    %204 = vector.load %arg15[%c0_123, %c0_124, %c0_125] : memref<1x1x32xf32, #tpu.memory_space<vmem>>, vector<1x1x32xf32>
    %205 = vector.shape_cast %204 : vector<1x1x32xf32> to vector<1x32xf32>
    %206 = vector.broadcast %205 : vector<1x32xf32> to vector<16x32xf32>
    %207 = arith.addf %203, %206 : vector<16x32xf32>
    %208 = arith.addf %3, %163 : vector<16x32xf32>
    %209 = arith.addf %208, %207 : vector<16x32xf32>
    %c0_126 = arith.constant 0 : index
    %c0_127 = arith.constant 0 : index
    %210 = vector.load %arg21[%c0_126, %c0_127] : memref<16x32xf32, #tpu.memory_space<vmem>>, vector<16x32xf32>
    tpu.vector_store %arg21[%c0_126, %c0_127], %209 {strides = array<i32>} : memref<16x32xf32, #tpu.memory_space<vmem>>, vector<16x32xf32>,
    %c1_i32 = arith.constant 1 : i32
    %211 = arith.cmpi eq, %arg1, %c1_i32 : i32
    %212 = arith.extui %211 : i1 to i32
    %c0_i32_128 = arith.constant 0 : i32
    %213 = arith.cmpi ne, %212, %c0_i32_128 : i32
    scf.if %213 {
      %c0_129 = arith.constant 0 : index
      %c0_130 = arith.constant 0 : index
      %214 = vector.load %arg16[%c0_129, %c0_130] : memref<1x32xf32, #tpu.memory_space<vmem>>, vector<1x32xf32>
      %c0_131 = arith.constant 0 : index
      %c0_132 = arith.constant 0 : index
      %215 = vector.load %arg17[%c0_131, %c0_132] : memref<1x32xf32, #tpu.memory_space<vmem>>, vector<1x32xf32>
      %cst_133 = arith.constant dense<0.000000e+00> : vector<16xf32>
      %216 = vector.multi_reduction <add>, %209, %cst_133 [1] : vector<16x32xf32> to vector<16xf32>
      %217 = vector.shape_cast %216 : vector<16xf32> to vector<16x1xf32>
      %cst_134 = arith.constant 3.200000e+01 : f32
      %218 = vector.broadcast %cst_134 : f32 to vector<16x1xf32>
      %219 = arith.divf %217, %218 : vector<16x1xf32>
      %220 = vector.broadcast %219 : vector<16x1xf32> to vector<16x32xf32>
      %221 = arith.subf %209, %220 : vector<16x32xf32>
      %222 = arith.mulf %221, %221 : vector<16x32xf32>
      %cst_135 = arith.constant dense<0.000000e+00> : vector<16xf32>
      %223 = vector.multi_reduction <add>, %222, %cst_135 [1] : vector<16x32xf32> to vector<16xf32>
      %224 = vector.shape_cast %223 : vector<16xf32> to vector<16x1xf32>
      %cst_136 = arith.constant 3.200000e+01 : f32
      %225 = vector.broadcast %cst_136 : f32 to vector<16x1xf32>
      %226 = arith.divf %224, %225 : vector<16x1xf32>
      %227 = vector.broadcast %219 : vector<16x1xf32> to vector<16x32xf32>
      %228 = arith.subf %209, %227 : vector<16x32xf32>
      %cst_137 = arith.constant 9.99999974E-6 : f32
      %229 = vector.broadcast %cst_137 : f32 to vector<16x1xf32>
      %230 = arith.addf %226, %229 : vector<16x1xf32>
      %231 = math.rsqrt %230 : vector<16x1xf32>
      %232 = vector.broadcast %231 : vector<16x1xf32> to vector<16x32xf32>
      %233 = arith.mulf %228, %232 : vector<16x32xf32>
      %234 = vector.broadcast %214 : vector<1x32xf32> to vector<16x32xf32>
      %235 = arith.mulf %233, %234 : vector<16x32xf32>
      %236 = vector.broadcast %215 : vector<1x32xf32> to vector<16x32xf32>
      %237 = arith.addf %235, %236 : vector<16x32xf32>
      %238 = arith.truncf %237 : vector<16x32xf32> to vector<16x32xbf16>
      %c0_138 = arith.constant 0 : index
      %c0_139 = arith.constant 0 : index
      %239 = vector.load %arg18[%c0_138, %c0_139] : memref<32x128xbf16, #tpu.memory_space<vmem>>, vector<32x128xbf16>
      %cst_140 = arith.constant dense<0.000000e+00> : vector<16x128xf32>
      %240 = tpu.matmul %238, %239, %cst_140 {dimension_numbers = #tpu.dot_dimension_numbers<[1], [0], [0], [1], [0, 0, 1, 1], [], []>} : vector<16x32xbf16>, vector<32x128xbf16>, vector<16x128xf32> -> vector<16x128xf32>
      %c0_141 = arith.constant 0 : index
      %c0_142 = arith.constant 0 : index
      %241 = vector.load %arg19[%c0_141, %c0_142] : memref<1x128xf32, #tpu.memory_space<vmem>>, vector<1x128xf32>
      %242 = vector.broadcast %241 : vector<1x128xf32> to vector<16x128xf32>
      %243 = arith.addf %240, %242 : vector<16x128xf32>
      %244 = vector.shape_cast %243 : vector<16x128xf32> to vector<2x8x128xf32>
      %c0_143 = arith.constant 0 : index
      %c0_144 = arith.constant 0 : index
      %c0_145 = arith.constant 0 : index
      %245 = vector.load %arg20[%c0_143, %c0_144, %c0_145] : memref<2x8x128xf32, #tpu.memory_space<vmem>>, vector<2x8x128xf32>
      tpu.vector_store %arg20[%c0_143, %c0_144, %c0_145], %244 {strides = array<i32>} : memref<2x8x128xf32, #tpu.memory_space<vmem>>, vector<2x8x128xf32>,
    } else {
    }
    return
  }
  func.func @transform_0(%arg0: i32, %arg1: i32) -> (i32, i32, i32) {
    %c0_i32 = arith.constant 0 : i32
    %c0_i32_0 = arith.constant 0 : i32
    %c0_i32_1 = arith.constant 0 : i32
    return %arg0, %c0_i32, %c0_i32_0 : i32, i32, i32
  }
  func.func @transform_1(%arg0: i32, %arg1: i32) -> (i32, i32) {
    %c0_i32 = arith.constant 0 : i32
    %c0_i32_0 = arith.constant 0 : i32
    %c0_i32_1 = arith.constant 0 : i32
    return %c0_i32, %c0_i32_0 : i32, i32
  }
  func.func @transform_2(%arg0: i32, %arg1: i32) -> (i32, i32) {
    %c0_i32 = arith.constant 0 : i32
    %c0_i32_0 = arith.constant 0 : i32
    %c0_i32_1 = arith.constant 0 : i32
    return %c0_i32, %c0_i32_0 : i32, i32
  }
  func.func @transform_3(%arg0: i32, %arg1: i32) -> (i32, i32, i32, i32) {
    %c0_i32 = arith.constant 0 : i32
    %c0_i32_0 = arith.constant 0 : i32
    %c0_i32_1 = arith.constant 0 : i32
    %c0_i32_2 = arith.constant 0 : i32
    return %arg1, %c0_i32, %c0_i32_0, %c0_i32_1 : i32, i32, i32, i32
  }
  func.func @transform_4(%arg0: i32, %arg1: i32) -> (i32, i32, i32, i32) {
    %c0_i32 = arith.constant 0 : i32
    %c0_i32_0 = arith.constant 0 : i32
    %c0_i32_1 = arith.constant 0 : i32
    %c0_i32_2 = arith.constant 0 : i32
    return %arg1, %c0_i32, %c0_i32_0, %c0_i32_1 : i32, i32, i32, i32
  }
  func.func @transform_5(%arg0: i32, %arg1: i32) -> (i32, i32, i32, i32) {
    %c0_i32 = arith.constant 0 : i32
    %c0_i32_0 = arith.constant 0 : i32
    %c0_i32_1 = arith.constant 0 : i32
    %c0_i32_2 = arith.constant 0 : i32
    return %arg1, %c0_i32, %c0_i32_0, %c0_i32_1 : i32, i32, i32, i32
  }
  func.func @transform_6(%arg0: i32, %arg1: i32) -> (i32, i32, i32) {
    %c0_i32 = arith.constant 0 : i32
    %c0_i32_0 = arith.constant 0 : i32
    %c0_i32_1 = arith.constant 0 : i32
    return %arg1, %c0_i32, %c0_i32_0 : i32, i32, i32
  }
  func.func @transform_7(%arg0: i32, %arg1: i32) -> (i32, i32, i32) {
    %c0_i32 = arith.constant 0 : i32
    %c0_i32_0 = arith.constant 0 : i32
    %c0_i32_1 = arith.constant 0 : i32
    return %arg1, %c0_i32, %c0_i32_0 : i32, i32, i32
  }
  func.func @transform_8(%arg0: i32, %arg1: i32) -> (i32, i32, i32) {
    %c0_i32 = arith.constant 0 : i32
    %c0_i32_0 = arith.constant 0 : i32
    %c0_i32_1 = arith.constant 0 : i32
    return %arg1, %c0_i32, %c0_i32_0 : i32, i32, i32
  }
  func.func @transform_9(%arg0: i32, %arg1: i32) -> (i32, i32, i32) {
    %c0_i32 = arith.constant 0 : i32
    %c0_i32_0 = arith.constant 0 : i32
    %c0_i32_1 = arith.constant 0 : i32
    return %arg1, %c0_i32, %c0_i32_0 : i32, i32, i32
  }
  func.func @transform_10(%arg0: i32, %arg1: i32) -> (i32, i32, i32) {
    %c0_i32 = arith.constant 0 : i32
    %c0_i32_0 = arith.constant 0 : i32
    %c0_i32_1 = arith.constant 0 : i32
    return %arg1, %c0_i32, %c0_i32_0 : i32, i32, i32
  }
  func.func @transform_11(%arg0: i32, %arg1: i32) -> (i32, i32, i32) {
    %c0_i32 = arith.constant 0 : i32
    %c0_i32_0 = arith.constant 0 : i32
    %c0_i32_1 = arith.constant 0 : i32
    return %arg1, %c0_i32, %c0_i32_0 : i32, i32, i32
  }
  func.func @transform_12(%arg0: i32, %arg1: i32) -> (i32, i32, i32) {
    %c0_i32 = arith.constant 0 : i32
    %c0_i32_0 = arith.constant 0 : i32
    %c0_i32_1 = arith.constant 0 : i32
    return %arg1, %c0_i32, %c0_i32_0 : i32, i32, i32
  }
  func.func @transform_13(%arg0: i32, %arg1: i32) -> (i32, i32, i32) {
    %c0_i32 = arith.constant 0 : i32
    %c0_i32_0 = arith.constant 0 : i32
    %c0_i32_1 = arith.constant 0 : i32
    return %arg1, %c0_i32, %c0_i32_0 : i32, i32, i32
  }
  func.func @transform_14(%arg0: i32, %arg1: i32) -> (i32, i32) {
    %c0_i32 = arith.constant 0 : i32
    %c0_i32_0 = arith.constant 0 : i32
    %c0_i32_1 = arith.constant 0 : i32
    return %c0_i32, %c0_i32_0 : i32, i32
  }
  func.func @transform_15(%arg0: i32, %arg1: i32) -> (i32, i32) {
    %c0_i32 = arith.constant 0 : i32
    %c0_i32_0 = arith.constant 0 : i32
    %c0_i32_1 = arith.constant 0 : i32
    return %c0_i32, %c0_i32_0 : i32, i32
  }
  func.func @transform_16(%arg0: i32, %arg1: i32) -> (i32, i32) {
    %c0_i32 = arith.constant 0 : i32
    %c0_i32_0 = arith.constant 0 : i32
    %c0_i32_1 = arith.constant 0 : i32
    return %c0_i32, %c0_i32_0 : i32, i32
  }
  func.func @transform_17(%arg0: i32, %arg1: i32) -> (i32, i32) {
    %c0_i32 = arith.constant 0 : i32
    %c0_i32_0 = arith.constant 0 : i32
    %c0_i32_1 = arith.constant 0 : i32
    return %c0_i32, %c0_i32_0 : i32, i32
  }
  func.func @transform_18(%arg0: i32, %arg1: i32) -> (i32, i32, i32) {
    %c0_i32 = arith.constant 0 : i32
    %c0_i32_0 = arith.constant 0 : i32
    %c0_i32_1 = arith.constant 0 : i32
    return %arg0, %c0_i32, %c0_i32_0 : i32, i32, i32
  }
}

</mosaic_0001>

<llo_original>
// kernel: decode_transformer.1
$region0: #{decode_transformer.1}
  #allocation0 [shape = 'u32[]', space=smem, size = 0x4, offset = 0x4, fixed_abs, tag = 'smem constant byte address 0x4 - core index']
  #allocation1 [shape = 'u32[72,128]{1,0:T(1,128)}', space=vmem, size = 0x9000, scoped, tag = 'internal scratch']
  #allocation2 [shape = 'f32[16,32]{1,0:T(8,128)}', space=vmem, size = 0x2000, scoped, tag = 'scratch operand']
  #allocation3 [shape = 'f32[16,32]{1,0:T(8,128)}', space=vmem, size = 0x2000, scoped, tag = 'scratch operand']
  %s0 = inlined_call_operand.vmem [shape: f32[2,8,16], index: 0, kind: input, shape index: {}]
  %s1 = inlined_call_operand.vmem [shape: f32[16,32], index: 1, kind: input, shape index: {}]
  %s2 = inlined_call_operand.vmem [shape: bf16[16,32], index: 2, kind: input, shape index: {}]
  %s3 = inlined_call_operand.vmem [shape: bf16[2,4,32,8], index: 3, kind: input, shape index: {}]
  %s4 = inlined_call_operand.vmem [shape: bf16[2,4,32,8], index: 4, kind: input, shape index: {}]
  %s5 = inlined_call_operand.vmem [shape: bf16[2,4,32,8], index: 5, kind: input, shape index: {}]
  %s6 = inlined_call_operand.vmem [shape: f32[2,1,32], index: 6, kind: input, shape index: {}]
  %s7 = inlined_call_operand.vmem [shape: f32[2,1,32], index: 7, kind: input, shape index: {}]
  %s8 = inlined_call_operand.vmem [shape: f32[2,1,32], index: 8, kind: input, shape index: {}]
  %s9 = inlined_call_operand.vmem [shape: f32[2,1,32], index: 9, kind: input, shape index: {}]
  %s10 = inlined_call_operand.vmem [shape: bf16[2,32,64], index: 10, kind: input, shape index: {}]
  %s11 = inlined_call_operand.vmem [shape: f32[2,1,64], index: 11, kind: input, shape index: {}]
  %s12 = inlined_call_operand.vmem [shape: bf16[2,64,32], index: 12, kind: input, shape index: {}]
  %s13 = inlined_call_operand.vmem [shape: f32[2,1,32], index: 13, kind: input, shape index: {}]
  %s14 = inlined_call_operand.vmem [shape: f32[1,32], index: 14, kind: input, shape index: {}]
  %s15 = inlined_call_operand.vmem [shape: f32[1,32], index: 15, kind: input, shape index: {}]
  %s16 = inlined_call_operand.vmem [shape: bf16[32,128], index: 16, kind: input, shape index: {}]
  %s17 = inlined_call_operand.vmem [shape: f32[1,128], index: 17, kind: input, shape index: {}]
  %s18 = inlined_call_operand.hbm [shape: f32[2,8,128], index: 18, kind: output, shape index: {}]
  %s19 = sld [smem:[#allocation0]]
  $region113: #{decode_transformer.1} parent=0
    _
  %s21 = ssub.s32 1, %s19
  %s22 = scalar_select 0, %s21, %s19
  $region1: #{decode_transformer.1} parent=0
    #allocation4 [shape = 'u8[8192]{0}', space=vmem, size = 0x2000, scoped, tag = 'output window, operand 0, single buffered']
    #allocation5 [shape = 's32[2]{0}', space=sflag, size = 0x8, scoped, tag = 'scoped memory for decode_transformer.1']
    %23 = vsyncpa [#allocation5], 0
    loop: start=0, step=1, limit=4
    $region2: #{decode_transformer.1} parent=1 // loop_pre_header
      _
    $region3: #{decode_transformer.1} parent=1 // loop_header
      %s25 = sphi 0, %s29
      %p26 = scmp.ge.s32.totalorder %s25, 4
      %s32 = sphi 0, %s44
      %s33 = sphi 0, %s40
      %s34 = sphi 0, %s32
      %s35 = sphi 0, %s33
      %s36 = sphi 0, %s34
      %s37 = sphi 0, %s35
      %s47 = sphi 0, %s49
      %s50 = sphi 0, %s47
      %s51 = sphi 0, %s50
      %s67 = sphi 0, %s51
      %s71 = sphi 0, %s71
      %s73 = sphi 0, %s71
      %s74 = sphi 0, %s73
      %s88 = sphi 0, %s74
      %s92 = sphi 0, %s92
      %s94 = sphi 0, %s92
      %s95 = sphi 0, %s94
      %s109 = sphi 0, %s95
      %s115 = sphi 0, %s117
      %s118 = sphi 0, %s115
      %s119 = sphi 0, %s118
      %s135 = sphi 0, %s119
      %s141 = sphi 0, %s143
      %s144 = sphi 0, %s141
      %s145 = sphi 0, %s144
      %s161 = sphi 0, %s145
      %s167 = sphi 0, %s169
      %s170 = sphi 0, %s167
      %s171 = sphi 0, %s170
      %s187 = sphi 0, %s171
      %s193 = sphi 0, %s195
      %s196 = sphi 0, %s193
      %s197 = sphi 0, %s196
      %s213 = sphi 0, %s197
      %s219 = sphi 0, %s221
      %s222 = sphi 0, %s219
      %s223 = sphi 0, %s222
      %s239 = sphi 0, %s223
      %s245 = sphi 0, %s247
      %s248 = sphi 0, %s245
      %s249 = sphi 0, %s248
      %s265 = sphi 0, %s249
      %s271 = sphi 0, %s273
      %s274 = sphi 0, %s271
      %s275 = sphi 0, %s274
      %s291 = sphi 0, %s275
      %s297 = sphi 0, %s299
      %s300 = sphi 0, %s297
      %s301 = sphi 0, %s300
      %s317 = sphi 0, %s301
      %s323 = sphi 0, %s325
      %s326 = sphi 0, %s323
      %s327 = sphi 0, %s326
      %s343 = sphi 0, %s327
      %s349 = sphi 0, %s351
      %s352 = sphi 0, %s349
      %s353 = sphi 0, %s352
      %s369 = sphi 0, %s353
      %s375 = sphi 0, %s377
      %s378 = sphi 0, %s375
      %s379 = sphi 0, %s378
      %s395 = sphi 0, %s379
      %s399 = sphi 0, %s399
      %s401 = sphi 0, %s399
      %s402 = sphi 0, %s401
      %s416 = sphi 0, %s402
      %s420 = sphi 0, %s420
      %s422 = sphi 0, %s420
      %s423 = sphi 0, %s422
      %s437 = sphi 0, %s423
      %s441 = sphi 0, %s441
      %s443 = sphi 0, %s441
      %s444 = sphi 0, %s443
      %s458 = sphi 0, %s444
      %s462 = sphi 0, %s462
      %s464 = sphi 0, %s462
      %s465 = sphi 0, %s464
      %s479 = sphi 0, %s465
      %s485 = sphi 0, %s487
      %s488 = sphi 0, %s485
      %s489 = sphi 0, %s488
      %s505 = sphi 0, %s489
    $region4: #{decode_transformer.1} parent=1 // loop_header_branch
      %28 = sbr.rel (%p26) target = $region8
    $region5: #{decode_transformer.1} parent=1 // loop_body
      %s30 = ssub.s32 %s25, 1
      %s31 = ssub.s32 %s25, 2
      %s38 = sadd.s32 1, %s33
      %p39 = scmp.ge.s32.totalorder %s38, 2
      %s40 = scalar_select %p39, 0, %s38
      %s41 = sadd.s32 1, %s32
      %s42 = scalar_select %p39, %s41, %s32
      %p43 = scmp.ge.s32.totalorder %s42, 1
      %s44 = scalar_select %p43, 0, %s42
      %s45 = ssub.s32 %s32, %s44
      %p46 = scmp.eq.s32.totalorder %s45, 0
      %s48 = sadd.s32 %s47, 1
      %s49 = scalar_select %p46, %s47, %s48
      %p52 = pneg %p46
      %p53 = scmp.eq.s32.totalorder %s25, 1
      %p54 = por %p52, %p53
      %p55 = scmp.ne.s32.totalorder %s47, %s50
      %p56 = scmp.eq.s32.totalorder %s25, 0
      %p57 = por %p55, %p56
      %p58 = scmp.ne.s32.totalorder %s47, %s50
      %p59 = scmp.eq.s32.totalorder %s30, 1
      %p60 = por %p58, %p59
      %p61 = scmp.ne.s32.totalorder %s50, %s51
      %p62 = scmp.eq.s32.totalorder %s30, 0
      %p63 = por %p61, %p62
      %p64 = scmp.ne.s32.totalorder %s50, %s51
      %p65 = scmp.eq.s32.totalorder %s31, 1
      %p66 = por %p64, %p65
      %p68 = scmp.ne.s32.totalorder %s51, %s67
      %p69 = scmp.eq.s32.totalorder %s31, 0
      %p70 = por %p68, %p69
      %s72 = sadd.s32 %s71, 1
      %p75 = scmp.eq.s32.totalorder %s25, 1
      %p76 = scmp.ne.s32.totalorder %s71, %s73
      %p77 = scmp.eq.s32.totalorder %s25, 0
      %p78 = por %p76, %p77
      %p79 = scmp.ne.s32.totalorder %s71, %s73
      %p80 = scmp.eq.s32.totalorder %s30, 1
      %p81 = por %p79, %p80
      %p82 = scmp.ne.s32.totalorder %s73, %s74
      %p83 = scmp.eq.s32.totalorder %s30, 0
      %p84 = por %p82, %p83
      %p85 = scmp.ne.s32.totalorder %s73, %s74
      %p86 = scmp.eq.s32.totalorder %s31, 1
      %p87 = por %p85, %p86
      %p89 = scmp.ne.s32.totalorder %s74, %s88
      %p90 = scmp.eq.s32.totalorder %s31, 0
      %p91 = por %p89, %p90
      %s93 = sadd.s32 %s92, 1
      %p96 = scmp.eq.s32.totalorder %s25, 1
      %p97 = scmp.ne.s32.totalorder %s92, %s94
      %p98 = scmp.eq.s32.totalorder %s25, 0
      %p99 = por %p97, %p98
      %p100 = scmp.ne.s32.totalorder %s92, %s94
      %p101 = scmp.eq.s32.totalorder %s30, 1
      %p102 = por %p100, %p101
      %p103 = scmp.ne.s32.totalorder %s94, %s95
      %p104 = scmp.eq.s32.totalorder %s30, 0
      %p105 = por %p103, %p104
      %p106 = scmp.ne.s32.totalorder %s94, %s95
      %p107 = scmp.eq.s32.totalorder %s31, 1
      %p108 = por %p106, %p107
      %p110 = scmp.ne.s32.totalorder %s95, %s109
      %p111 = scmp.eq.s32.totalorder %s31, 0
      %p112 = por %p110, %p111
      %s113 = ssub.s32 %s33, %s40
      %p114 = scmp.eq.s32.totalorder %s113, 0
      %s116 = sadd.s32 %s115, 1
      %s117 = scalar_select %p114, %s115, %s116
      %p120 = pneg %p114
      %p121 = scmp.eq.s32.totalorder %s25, 1
      %p122 = por %p120, %p121
      %p123 = scmp.ne.s32.totalorder %s115, %s118
      %p124 = scmp.eq.s32.totalorder %s25, 0
      %p125 = por %p123, %p124
      %p126 = scmp.ne.s32.totalorder %s115, %s118
      %p127 = scmp.eq.s32.totalorder %s30, 1
      %p128 = por %p126, %p127
      %p129 = scmp.ne.s32.totalorder %s118, %s119
      %p130 = scmp.eq.s32.totalorder %s30, 0
      %p131 = por %p129, %p130
      %p132 = scmp.ne.s32.totalorder %s118, %s119
      %p133 = scmp.eq.s32.totalorder %s31, 1
      %p134 = por %p132, %p133
      %p136 = scmp.ne.s32.totalorder %s119, %s135
      %p137 = scmp.eq.s32.totalorder %s31, 0
      %p138 = por %p136, %p137
      %s139 = ssub.s32 %s33, %s40
      %p140 = scmp.eq.s32.totalorder %s139, 0
      %s142 = sadd.s32 %s141, 1
      %s143 = scalar_select %p140, %s141, %s142
      %p146 = pneg %p140
      %p147 = scmp.eq.s32.totalorder %s25, 1
      %p148 = por %p146, %p147
      %p149 = scmp.ne.s32.totalorder %s141, %s144
      %p150 = scmp.eq.s32.totalorder %s25, 0
      %p151 = por %p149, %p150
      %p152 = scmp.ne.s32.totalorder %s141, %s144
      %p153 = scmp.eq.s32.totalorder %s30, 1
      %p154 = por %p152, %p153
      %p155 = scmp.ne.s32.totalorder %s144, %s145
      %p156 = scmp.eq.s32.totalorder %s30, 0
      %p157 = por %p155, %p156
      %p158 = scmp.ne.s32.totalorder %s144, %s145
      %p159 = scmp.eq.s32.totalorder %s31, 1
      %p160 = por %p158, %p159
      %p162 = scmp.ne.s32.totalorder %s145, %s161
      %p163 = scmp.eq.s32.totalorder %s31, 0
      %p164 = por %p162, %p163
      %s165 = ssub.s32 %s33, %s40
      %p166 = scmp.eq.s32.totalorder %s165, 0
      %s168 = sadd.s32 %s167, 1
      %s169 = scalar_select %p166, %s167, %s168
      %p172 = pneg %p166
      %p173 = scmp.eq.s32.totalorder %s25, 1
      %p174 = por %p172, %p173
      %p175 = scmp.ne.s32.totalorder %s167, %s170
      %p176 = scmp.eq.s32.totalorder %s25, 0
      %p177 = por %p175, %p176
      %p178 = scmp.ne.s32.totalorder %s167, %s170
      %p179 = scmp.eq.s32.totalorder %s30, 1
      %p180 = por %p178, %p179
      %p181 = scmp.ne.s32.totalorder %s170, %s171
      %p182 = scmp.eq.s32.totalorder %s30, 0
      %p183 = por %p181, %p182
      %p184 = scmp.ne.s32.totalorder %s170, %s171
      %p185 = scmp.eq.s32.totalorder %s31, 1
      %p186 = por %p184, %p185
      %p188 = scmp.ne.s32.totalorder %s171, %s187
      %p189 = scmp.eq.s32.totalorder %s31, 0
      %p190 = por %p188, %p189
      %s191 = ssub.s32 %s33, %s40
      %p192 = scmp.eq.s32.totalorder %s191, 0
      %s194 = sadd.s32 %s193, 1
      %s195 = scalar_select %p192, %s193, %s194
      %p198 = pneg %p192
      %p199 = scmp.eq.s32.totalorder %s25, 1
      %p200 = por %p198, %p199
      %p201 = scmp.ne.s32.totalorder %s193, %s196
      %p202 = scmp.eq.s32.totalorder %s25, 0
      %p203 = por %p201, %p202
      %p204 = scmp.ne.s32.totalorder %s193, %s196
      %p205 = scmp.eq.s32.totalorder %s30, 1
      %p206 = por %p204, %p205
      %p207 = scmp.ne.s32.totalorder %s196, %s197
      %p208 = scmp.eq.s32.totalorder %s30, 0
      %p209 = por %p207, %p208
      %p210 = scmp.ne.s32.totalorder %s196, %s197
      %p211 = scmp.eq.s32.totalorder %s31, 1
      %p212 = por %p210, %p211
      %p214 = scmp.ne.s32.totalorder %s197, %s213
      %p215 = scmp.eq.s32.totalorder %s31, 0
      %p216 = por %p214, %p215
      %s217 = ssub.s32 %s33, %s40
      %p218 = scmp.eq.s32.totalorder %s217, 0
      %s220 = sadd.s32 %s219, 1
      %s221 = scalar_select %p218, %s219, %s220
      %p224 = pneg %p218
      %p225 = scmp.eq.s32.totalorder %s25, 1
      %p226 = por %p224, %p225
      %p227 = scmp.ne.s32.totalorder %s219, %s222
      %p228 = scmp.eq.s32.totalorder %s25, 0
      %p229 = por %p227, %p228
      %p230 = scmp.ne.s32.totalorder %s219, %s222
      %p231 = scmp.eq.s32.totalorder %s30, 1
      %p232 = por %p230, %p231
      %p233 = scmp.ne.s32.totalorder %s222, %s223
      %p234 = scmp.eq.s32.totalorder %s30, 0
      %p235 = por %p233, %p234
      %p236 = scmp.ne.s32.totalorder %s222, %s223
      %p237 = scmp.eq.s32.totalorder %s31, 1
      %p238 = por %p236, %p237
      %p240 = scmp.ne.s32.totalorder %s223, %s239
      %p241 = scmp.eq.s32.totalorder %s31, 0
      %p242 = por %p240, %p241
      %s243 = ssub.s32 %s33, %s40
      %p244 = scmp.eq.s32.totalorder %s243, 0
      %s246 = sadd.s32 %s245, 1
      %s247 = scalar_select %p244, %s245, %s246
      %p250 = pneg %p244
      %p251 = scmp.eq.s32.totalorder %s25, 1
      %p252 = por %p250, %p251
      %p253 = scmp.ne.s32.totalorder %s245, %s248
      %p254 = scmp.eq.s32.totalorder %s25, 0
      %p255 = por %p253, %p254
      %p256 = scmp.ne.s32.totalorder %s245, %s248
      %p257 = scmp.eq.s32.totalorder %s30, 1
      %p258 = por %p256, %p257
      %p259 = scmp.ne.s32.totalorder %s248, %s249
      %p260 = scmp.eq.s32.totalorder %s30, 0
      %p261 = por %p259, %p260
      %p262 = scmp.ne.s32.totalorder %s248, %s249
      %p263 = scmp.eq.s32.totalorder %s31, 1
      %p264 = por %p262, %p263
      %p266 = scmp.ne.s32.totalorder %s249, %s265
      %p267 = scmp.eq.s32.totalorder %s31, 0
      %p268 = por %p266, %p267
      %s269 = ssub.s32 %s33, %s40
      %p270 = scmp.eq.s32.totalorder %s269, 0
      %s272 = sadd.s32 %s271, 1
      %s273 = scalar_select %p270, %s271, %s272
      %p276 = pneg %p270
      %p277 = scmp.eq.s32.totalorder %s25, 1
      %p278 = por %p276, %p277
      %p279 = scmp.ne.s32.totalorder %s271, %s274
      %p280 = scmp.eq.s32.totalorder %s25, 0
      %p281 = por %p279, %p280
      %p282 = scmp.ne.s32.totalorder %s271, %s274
      %p283 = scmp.eq.s32.totalorder %s30, 1
      %p284 = por %p282, %p283
      %p285 = scmp.ne.s32.totalorder %s274, %s275
      %p286 = scmp.eq.s32.totalorder %s30, 0
      %p287 = por %p285, %p286
      %p288 = scmp.ne.s32.totalorder %s274, %s275
      %p289 = scmp.eq.s32.totalorder %s31, 1
      %p290 = por %p288, %p289
      %p292 = scmp.ne.s32.totalorder %s275, %s291
      %p293 = scmp.eq.s32.totalorder %s31, 0
      %p294 = por %p292, %p293
      %s295 = ssub.s32 %s33, %s40
      %p296 = scmp.eq.s32.totalorder %s295, 0
      %s298 = sadd.s32 %s297, 1
      %s299 = scalar_select %p296, %s297, %s298
      %p302 = pneg %p296
      %p303 = scmp.eq.s32.totalorder %s25, 1
      %p304 = por %p302, %p303
      %p305 = scmp.ne.s32.totalorder %s297, %s300
      %p306 = scmp.eq.s32.totalorder %s25, 0
      %p307 = por %p305, %p306
      %p308 = scmp.ne.s32.totalorder %s297, %s300
      %p309 = scmp.eq.s32.totalorder %s30, 1
      %p310 = por %p308, %p309
      %p311 = scmp.ne.s32.totalorder %s300, %s301
      %p312 = scmp.eq.s32.totalorder %s30, 0
      %p313 = por %p311, %p312
      %p314 = scmp.ne.s32.totalorder %s300, %s301
      %p315 = scmp.eq.s32.totalorder %s31, 1
      %p316 = por %p314, %p315
      %p318 = scmp.ne.s32.totalorder %s301, %s317
      %p319 = scmp.eq.s32.totalorder %s31, 0
      %p320 = por %p318, %p319
      %s321 = ssub.s32 %s33, %s40
      %p322 = scmp.eq.s32.totalorder %s321, 0
      %s324 = sadd.s32 %s323, 1
      %s325 = scalar_select %p322, %s323, %s324
      %p328 = pneg %p322
      %p329 = scmp.eq.s32.totalorder %s25, 1
      %p330 = por %p328, %p329
      %p331 = scmp.ne.s32.totalorder %s323, %s326
      %p332 = scmp.eq.s32.totalorder %s25, 0
      %p333 = por %p331, %p332
      %p334 = scmp.ne.s32.totalorder %s323, %s326
      %p335 = scmp.eq.s32.totalorder %s30, 1
      %p336 = por %p334, %p335
      %p337 = scmp.ne.s32.totalorder %s326, %s327
      %p338 = scmp.eq.s32.totalorder %s30, 0
      %p339 = por %p337, %p338
      %p340 = scmp.ne.s32.totalorder %s326, %s327
      %p341 = scmp.eq.s32.totalorder %s31, 1
      %p342 = por %p340, %p341
      %p344 = scmp.ne.s32.totalorder %s327, %s343
      %p345 = scmp.eq.s32.totalorder %s31, 0
      %p346 = por %p344, %p345
      %s347 = ssub.s32 %s33, %s40
      %p348 = scmp.eq.s32.totalorder %s347, 0
      %s350 = sadd.s32 %s349, 1
      %s351 = scalar_select %p348, %s349, %s350
      %p354 = pneg %p348
      %p355 = scmp.eq.s32.totalorder %s25, 1
      %p356 = por %p354, %p355
      %p357 = scmp.ne.s32.totalorder %s349, %s352
      %p358 = scmp.eq.s32.totalorder %s25, 0
      %p359 = por %p357, %p358
      %p360 = scmp.ne.s32.totalorder %s349, %s352
      %p361 = scmp.eq.s32.totalorder %s30, 1
      %p362 = por %p360, %p361
      %p363 = scmp.ne.s32.totalorder %s352, %s353
      %p364 = scmp.eq.s32.totalorder %s30, 0
      %p365 = por %p363, %p364
      %p366 = scmp.ne.s32.totalorder %s352, %s353
      %p367 = scmp.eq.s32.totalorder %s31, 1
      %p368 = por %p366, %p367
      %p370 = scmp.ne.s32.totalorder %s353, %s369
      %p371 = scmp.eq.s32.totalorder %s31, 0
      %p372 = por %p370, %p371
      %s373 = ssub.s32 %s33, %s40
      %p374 = scmp.eq.s32.totalorder %s373, 0
      %s376 = sadd.s32 %s375, 1
      %s377 = scalar_select %p374, %s375, %s376
      %p380 = pneg %p374
      %p381 = scmp.eq.s32.totalorder %s25, 1
      %p382 = por %p380, %p381
      %p383 = scmp.ne.s32.totalorder %s375, %s378
      %p384 = scmp.eq.s32.totalorder %s25, 0
      %p385 = por %p383, %p384
      %p386 = scmp.ne.s32.totalorder %s375, %s378
      %p387 = scmp.eq.s32.totalorder %s30, 1
      %p388 = por %p386, %p387
      %p389 = scmp.ne.s32.totalorder %s378, %s379
      %p390 = scmp.eq.s32.totalorder %s30, 0
      %p391 = por %p389, %p390
      %p392 = scmp.ne.s32.totalorder %s378, %s379
      %p393 = scmp.eq.s32.totalorder %s31, 1
      %p394 = por %p392, %p393
      %p396 = scmp.ne.s32.totalorder %s379, %s395
      %p397 = scmp.eq.s32.totalorder %s31, 0
      %p398 = por %p396, %p397
      %s400 = sadd.s32 %s399, 1
      %p403 = scmp.eq.s32.totalorder %s25, 1
      %p404 = scmp.ne.s32.totalorder %s399, %s401
      %p405 = scmp.eq.s32.totalorder %s25, 0
      %p406 = por %p404, %p405
      %p407 = scmp.ne.s32.totalorder %s399, %s401
      %p408 = scmp.eq.s32.totalorder %s30, 1
      %p409 = por %p407, %p408
      %p410 = scmp.ne.s32.totalorder %s401, %s402
      %p411 = scmp.eq.s32.totalorder %s30, 0
      %p412 = por %p410, %p411
      %p413 = scmp.ne.s32.totalorder %s401, %s402
      %p414 = scmp.eq.s32.totalorder %s31, 1
      %p415 = por %p413, %p414
      %p417 = scmp.ne.s32.totalorder %s402, %s416
      %p418 = scmp.eq.s32.totalorder %s31, 0
      %p419 = por %p417, %p418
      %s421 = sadd.s32 %s420, 1
      %p424 = scmp.eq.s32.totalorder %s25, 1
      %p425 = scmp.ne.s32.totalorder %s420, %s422
      %p426 = scmp.eq.s32.totalorder %s25, 0
      %p427 = por %p425, %p426
      %p428 = scmp.ne.s32.totalorder %s420, %s422
      %p429 = scmp.eq.s32.totalorder %s30, 1
      %p430 = por %p428, %p429
      %p431 = scmp.ne.s32.totalorder %s422, %s423
      %p432 = scmp.eq.s32.totalorder %s30, 0
      %p433 = por %p431, %p432
      %p434 = scmp.ne.s32.totalorder %s422, %s423
      %p435 = scmp.eq.s32.totalorder %s31, 1
      %p436 = por %p434, %p435
      %p438 = scmp.ne.s32.totalorder %s423, %s437
      %p439 = scmp.eq.s32.totalorder %s31, 0
      %p440 = por %p438, %p439
      %s442 = sadd.s32 %s441, 1
      %p445 = scmp.eq.s32.totalorder %s25, 1
      %p446 = scmp.ne.s32.totalorder %s441, %s443
      %p447 = scmp.eq.s32.totalorder %s25, 0
      %p448 = por %p446, %p447
      %p449 = scmp.ne.s32.totalorder %s441, %s443
      %p450 = scmp.eq.s32.totalorder %s30, 1
      %p451 = por %p449, %p450
      %p452 = scmp.ne.s32.totalorder %s443, %s444
      %p453 = scmp.eq.s32.totalorder %s30, 0
      %p454 = por %p452, %p453
      %p455 = scmp.ne.s32.totalorder %s443, %s444
      %p456 = scmp.eq.s32.totalorder %s31, 1
      %p457 = por %p455, %p456
      %p459 = scmp.ne.s32.totalorder %s444, %s458
      %p460 = scmp.eq.s32.totalorder %s31, 0
      %p461 = por %p459, %p460
      %s463 = sadd.s32 %s462, 1
      %p466 = scmp.eq.s32.totalorder %s25, 1
      %p467 = scmp.ne.s32.totalorder %s462, %s464
      %p468 = scmp.eq.s32.totalorder %s25, 0
      %p469 = por %p467, %p468
      %p470 = scmp.ne.s32.totalorder %s462, %s464
      %p471 = scmp.eq.s32.totalorder %s30, 1
      %p472 = por %p470, %p471
      %p473 = scmp.ne.s32.totalorder %s464, %s465
      %p474 = scmp.eq.s32.totalorder %s30, 0
      %p475 = por %p473, %p474
      %p476 = scmp.ne.s32.totalorder %s464, %s465
      %p477 = scmp.eq.s32.totalorder %s31, 1
      %p478 = por %p476, %p477
      %p480 = scmp.ne.s32.totalorder %s465, %s479
      %p481 = scmp.eq.s32.totalorder %s31, 0
      %p482 = por %p480, %p481
      %s483 = ssub.s32 %s32, %s44
      %p484 = scmp.eq.s32.totalorder %s483, 0
      %s486 = sadd.s32 %s485, 1
      %s487 = scalar_select %p484, %s485, %s486
      %p490 = pneg %p484
      %p491 = scmp.eq.s32.totalorder %s25, 1
      %p492 = por %p490, %p491
      %p493 = scmp.ne.s32.totalorder %s485, %s488
      %p494 = scmp.eq.s32.totalorder %s25, 0
      %p495 = por %p493, %p494
      %p496 = scmp.ne.s32.totalorder %s485, %s488
      %p497 = scmp.eq.s32.totalorder %s30, 1
      %p498 = por %p496, %p497
      %p499 = scmp.ne.s32.totalorder %s488, %s489
      %p500 = scmp.eq.s32.totalorder %s30, 0
      %p501 = por %p499, %p500
      %p502 = scmp.ne.s32.totalorder %s488, %s489
      %p503 = scmp.eq.s32.totalorder %s31, 1
      %p504 = por %p502, %p503
      %p506 = scmp.ne.s32.totalorder %s489, %s505
      %p507 = scmp.eq.s32.totalorder %s31, 0
      %p508 = por %p506, %p507
      %p509 = scmp.le.s32.totalorder 1, %s25
      %p510 = scmp.lt.s32.totalorder %s25, 3
      %p511 = pnand %p509, %p510
      %p512 = pneg %p511
      // Predicated region
      $region9: #{decode_transformer.1} parent=5 // pred_check
        _
      $region10: #{decode_transformer.1} parent=5 // pred_check_branch
        %514 = sbr.rel (%p511) target = $region12
      $region11: #{decode_transformer.1} parent=5 // pred_region
        %s515 = ssub.s32 %s25, 1
        // Predicated region
        $region13: #{decode_transformer.1} parent=11 // pred_check
          %p516 = pneg %p63
        $region14: #{decode_transformer.1} parent=11 // pred_check_branch
          %518 = sbr.rel (%p516) target = $region16
        $region15: #{decode_transformer.1} parent=11 // pred_region
          %s519 = smul.u32 2, %s34
          %p520 = scmp.lt.s32.totalorder %s519, 1
          %s521 = scalar_select %p520, %s519, 1
          %s522 = smul.addr %s521, 8
          %s523 = scalar_lea.vmem %s0, %s522
          %s524 = smul.u32 2, %s34
        $region16: #{decode_transformer.1} parent=11 // pred_fallthru
          _
        // Predicated region
        $region17: #{decode_transformer.1} parent=11 // pred_check
          %p525 = pneg %p84
        $region18: #{decode_transformer.1} parent=11 // pred_check_branch
          %527 = sbr.rel (%p525) target = $region20
        $region19: #{decode_transformer.1} parent=11 // pred_region
          _
        $region20: #{decode_transformer.1} parent=11 // pred_fallthru
          _
        // Predicated region
        $region21: #{decode_transformer.1} parent=11 // pred_check
          %p528 = pneg %p105
        $region22: #{decode_transformer.1} parent=11 // pred_check_branch
          %530 = sbr.rel (%p528) target = $region24
        $region23: #{decode_transformer.1} parent=11 // pred_region
          _
        $region24: #{decode_transformer.1} parent=11 // pred_fallthru
          _
        // Predicated region
        $region25: #{decode_transformer.1} parent=11 // pred_check
          %p531 = pneg %p412
        $region26: #{decode_transformer.1} parent=11 // pred_check_branch
          %533 = sbr.rel (%p531) target = $region28
        $region27: #{decode_transformer.1} parent=11 // pred_region
          _
        $region28: #{decode_transformer.1} parent=11 // pred_fallthru
          _
        // Predicated region
        $region29: #{decode_transformer.1} parent=11 // pred_check
          %p534 = pneg %p433
        $region30: #{decode_transformer.1} parent=11 // pred_check_branch
          %536 = sbr.rel (%p534) target = $region32
        $region31: #{decode_transformer.1} parent=11 // pred_region
          _
        $region32: #{decode_transformer.1} parent=11 // pred_fallthru
          _
        // Predicated region
        $region33: #{decode_transformer.1} parent=11 // pred_check
          %p537 = pneg %p454
        $region34: #{decode_transformer.1} parent=11 // pred_check_branch
          %539 = sbr.rel (%p537) target = $region36
        $region35: #{decode_transformer.1} parent=11 // pred_region
          _
        $region36: #{decode_transformer.1} parent=11 // pred_fallthru
          _
        // Predicated region
        $region37: #{decode_transformer.1} parent=11 // pred_check
          %p540 = pneg %p475
        $region38: #{decode_transformer.1} parent=11 // pred_check_branch
          %542 = sbr.rel (%p540) target = $region40
        $region39: #{decode_transformer.1} parent=11 // pred_region
          _
        $region40: #{decode_transformer.1} parent=11 // pred_fallthru
          _
      $region12: #{decode_transformer.1} parent=5 // pred_fallthru
        _
      %p543 = scmp.lt.s32.totalorder %s25, 2
      // Predicated region
      $region41: #{decode_transformer.1} parent=5 // pred_check
        %p544 = pneg %p543
      $region42: #{decode_transformer.1} parent=5 // pred_check_branch
        %546 = sbr.rel (%p544) target = $region44
      $region43: #{decode_transformer.1} parent=5 // pred_region
        // Predicated region
        $region45: #{decode_transformer.1} parent=43 // pred_check
          %p547 = pneg %p125
        $region46: #{decode_transformer.1} parent=43 // pred_check_branch
          %549 = sbr.rel (%p547) target = $region48
        $region47: #{decode_transformer.1} parent=43 // pred_region
          %p550 = scmp.lt.s32.totalorder %s33, 1
          %s551 = scalar_select %p550, %s33, 1
          %s552 = smul.addr %s551, 16
          %s553 = smul.addr %s552, 4
          %s554 = scalar_lea.vmem %s3, %s553
        $region48: #{decode_transformer.1} parent=43 // pred_fallthru
          _
        // Predicated region
        $region49: #{decode_transformer.1} parent=43 // pred_check
          %p555 = pneg %p151
        $region50: #{decode_transformer.1} parent=43 // pred_check_branch
          %557 = sbr.rel (%p555) target = $region52
        $region51: #{decode_transformer.1} parent=43 // pred_region
          %p558 = scmp.lt.s32.totalorder %s33, 1
          %s559 = scalar_select %p558, %s33, 1
          %s560 = smul.addr %s559, 16
          %s561 = smul.addr %s560, 4
          %s562 = scalar_lea.vmem %s4, %s561
        $region52: #{decode_transformer.1} parent=43 // pred_fallthru
          _
        // Predicated region
        $region53: #{decode_transformer.1} parent=43 // pred_check
          %p563 = pneg %p177
        $region54: #{decode_transformer.1} parent=43 // pred_check_branch
          %565 = sbr.rel (%p563) target = $region56
        $region55: #{decode_transformer.1} parent=43 // pred_region
          %p566 = scmp.lt.s32.totalorder %s33, 1
          %s567 = scalar_select %p566, %s33, 1
          %s568 = smul.addr %s567, 16
          %s569 = smul.addr %s568, 4
          %s570 = scalar_lea.vmem %s5, %s569
        $region56: #{decode_transformer.1} parent=43 // pred_fallthru
          _
        // Predicated region
        $region57: #{decode_transformer.1} parent=43 // pred_check
          %p571 = pneg %p203
        $region58: #{decode_transformer.1} parent=43 // pred_check_branch
          %573 = sbr.rel (%p571) target = $region60
        $region59: #{decode_transformer.1} parent=43 // pred_region
          %p574 = scmp.lt.s32.totalorder %s33, 1
          %s575 = scalar_select %p574, %s33, 1
          %s576 = scalar_lea.vmem %s6, %s575
        $region60: #{decode_transformer.1} parent=43 // pred_fallthru
          _
        // Predicated region
        $region61: #{decode_transformer.1} parent=43 // pred_check
          %p577 = pneg %p229
        $region62: #{decode_transformer.1} parent=43 // pred_check_branch
          %579 = sbr.rel (%p577) target = $region64
        $region63: #{decode_transformer.1} parent=43 // pred_region
          %p580 = scmp.lt.s32.totalorder %s33, 1
          %s581 = scalar_select %p580, %s33, 1
          %s582 = scalar_lea.vmem %s7, %s581
        $region64: #{decode_transformer.1} parent=43 // pred_fallthru
          _
        // Predicated region
        $region65: #{decode_transformer.1} parent=43 // pred_check
          %p583 = pneg %p255
        $region66: #{decode_transformer.1} parent=43 // pred_check_branch
          %585 = sbr.rel (%p583) target = $region68
        $region67: #{decode_transformer.1} parent=43 // pred_region
          %p586 = scmp.lt.s32.totalorder %s33, 1
          %s587 = scalar_select %p586, %s33, 1
          %s588 = scalar_lea.vmem %s8, %s587
        $region68: #{decode_transformer.1} parent=43 // pred_fallthru
          _
        // Predicated region
        $region69: #{decode_transformer.1} parent=43 // pred_check
          %p589 = pneg %p281
        $region70: #{decode_transformer.1} parent=43 // pred_check_branch
          %591 = sbr.rel (%p589) target = $region72
        $region71: #{decode_transformer.1} parent=43 // pred_region
          %p592 = scmp.lt.s32.totalorder %s33, 1
          %s593 = scalar_select %p592, %s33, 1
          %s594 = scalar_lea.vmem %s9, %s593
        $region72: #{decode_transformer.1} parent=43 // pred_fallthru
          _
        // Predicated region
        $region73: #{decode_transformer.1} parent=43 // pred_check
          %p595 = pneg %p307
        $region74: #{decode_transformer.1} parent=43 // pred_check_branch
          %597 = sbr.rel (%p595) target = $region76
        $region75: #{decode_transformer.1} parent=43 // pred_region
          %p598 = scmp.lt.s32.totalorder %s33, 1
          %s599 = scalar_select %p598, %s33, 1
          %s600 = smul.addr %s599, 4
          %s601 = smul.addr %s600, 4
          %s602 = scalar_lea.vmem %s10, %s601
        $region76: #{decode_transformer.1} parent=43 // pred_fallthru
          _
        // Predicated region
        $region77: #{decode_transformer.1} parent=43 // pred_check
          %p603 = pneg %p333
        $region78: #{decode_transformer.1} parent=43 // pred_check_branch
          %605 = sbr.rel (%p603) target = $region80
        $region79: #{decode_transformer.1} parent=43 // pred_region
          %p606 = scmp.lt.s32.totalorder %s33, 1
          %s607 = scalar_select %p606, %s33, 1
          %s608 = scalar_lea.vmem %s11, %s607
        $region80: #{decode_transformer.1} parent=43 // pred_fallthru
          _
        // Predicated region
        $region81: #{decode_transformer.1} parent=43 // pred_check
          %p609 = pneg %p359
        $region82: #{decode_transformer.1} parent=43 // pred_check_branch
          %611 = sbr.rel (%p609) target = $region84
        $region83: #{decode_transformer.1} parent=43 // pred_region
          %p612 = scmp.lt.s32.totalorder %s33, 1
          %s613 = scalar_select %p612, %s33, 1
          %s614 = smul.addr %s613, 8
          %s615 = smul.addr %s614, 4
          %s616 = scalar_lea.vmem %s12, %s615
        $region84: #{decode_transformer.1} parent=43 // pred_fallthru
          _
        // Predicated region
        $region85: #{decode_transformer.1} parent=43 // pred_check
          %p617 = pneg %p385
        $region86: #{decode_transformer.1} parent=43 // pred_check_branch
          %619 = sbr.rel (%p617) target = $region88
        $region87: #{decode_transformer.1} parent=43 // pred_region
          %p620 = scmp.lt.s32.totalorder %s33, 1
          %s621 = scalar_select %p620, %s33, 1
          %s622 = scalar_lea.vmem %s13, %s621
        $region88: #{decode_transformer.1} parent=43 // pred_fallthru
          _
      $region44: #{decode_transformer.1} parent=5 // pred_fallthru
        _
      %p623 = scmp.le.s32.totalorder 1, %s25
      %p624 = scmp.lt.s32.totalorder %s25, 3
      %p625 = pnand %p623, %p624
      %p626 = pneg %p625
      // Predicated region
      $region89: #{decode_transformer.1} parent=5 // pred_check
        _
      $region90: #{decode_transformer.1} parent=5 // pred_check_branch
        %628 = sbr.rel (%p625) target = $region92
      $region91: #{decode_transformer.1} parent=5 // pred_region
        %s629 = ssub.s32 %s25, 1
        %s630 = smul.u32 2, %s34
        %p631 = scmp.lt.s32.totalorder %s630, 1
        %s632 = scalar_select %p631, %s630, 1
        %s633 = smul.addr %s632, 8
        %s634 = scalar_lea.vmem %s0, %s633
        %p635 = pneg %p63
        %p636 = pneg %p60
        %p637 = pneg %p84
        %p638 = pneg %p81
        %p639 = pneg %p105
        %p640 = pneg %p102
        %p641 = scmp.lt.s32.totalorder %s35, 1
        %s642 = scalar_select %p641, %s35, 1
        %s643 = smul.addr %s642, 16
        %s644 = smul.addr %s643, 4
        %s645 = scalar_lea.vmem %s3, %s644
        %p646 = pneg %p131
        %p647 = pneg %p128
        %p648 = scmp.lt.s32.totalorder %s35, 1
        %s649 = scalar_select %p648, %s35, 1
        %s650 = smul.addr %s649, 16
        %s651 = smul.addr %s650, 4
        %s652 = scalar_lea.vmem %s4, %s651
        %p653 = pneg %p157
        %p654 = pneg %p154
        %p655 = scmp.lt.s32.totalorder %s35, 1
        %s656 = scalar_select %p655, %s35, 1
        %s657 = smul.addr %s656, 16
        %s658 = smul.addr %s657, 4
        %s659 = scalar_lea.vmem %s5, %s658
        %p660 = pneg %p183
        %p661 = pneg %p180
        %p662 = scmp.lt.s32.totalorder %s35, 1
        %s663 = scalar_select %p662, %s35, 1
        %s664 = scalar_lea.vmem %s6, %s663
        %p665 = pneg %p209
        %p666 = pneg %p206
        %p667 = scmp.lt.s32.totalorder %s35, 1
        %s668 = scalar_select %p667, %s35, 1
        %s669 = scalar_lea.vmem %s7, %s668
        %p670 = pneg %p235
        %p671 = pneg %p232
        %p672 = scmp.lt.s32.totalorder %s35, 1
        %s673 = scalar_select %p672, %s35, 1
        %s674 = scalar_lea.vmem %s8, %s673
        %p675 = pneg %p261
        %p676 = pneg %p258
        %p677 = scmp.lt.s32.totalorder %s35, 1
        %s678 = scalar_select %p677, %s35, 1
        %s679 = scalar_lea.vmem %s9, %s678
        %p680 = pneg %p287
        %p681 = pneg %p284
        %p682 = scmp.lt.s32.totalorder %s35, 1
        %s683 = scalar_select %p682, %s35, 1
        %s684 = smul.addr %s683, 4
        %s685 = smul.addr %s684, 4
        %s686 = scalar_lea.vmem %s10, %s685
        %p687 = pneg %p313
        %p688 = pneg %p310
        %p689 = scmp.lt.s32.totalorder %s35, 1
        %s690 = scalar_select %p689, %s35, 1
        %s691 = scalar_lea.vmem %s11, %s690
        %p692 = pneg %p339
        %p693 = pneg %p336
        %p694 = scmp.lt.s32.totalorder %s35, 1
        %s695 = scalar_select %p694, %s35, 1
        %s696 = smul.addr %s695, 8
        %s697 = smul.addr %s696, 4
        %s698 = scalar_lea.vmem %s12, %s697
        %p699 = pneg %p365
        %p700 = pneg %p362
        %p701 = scmp.lt.s32.totalorder %s35, 1
        %s702 = scalar_select %p701, %s35, 1
        %s703 = scalar_lea.vmem %s13, %s702
        %p704 = pneg %p391
        %p705 = pneg %p388
        %p706 = pneg %p412
        %p707 = pneg %p409
        %p708 = pneg %p433
        %p709 = pneg %p430
        %p710 = pneg %p454
        %p711 = pneg %p451
        %p712 = pneg %p475
        %p713 = pneg %p472
        %p714 = pneg %p501
        %p715 = pneg %p498
        %s716 = smul.u32 2, %s34
        %p717 = scmp.lt.s32.totalorder %s716, 1
        %s718 = scalar_select %p717, %s716, 1
        %s719 = smul.addr %s718, 8
        %s720 = scalar_lea.vmem %s0, %s719
        %s721 = smul.u32 2, %s34
        %p722 = scmp.lt.s32.totalorder %s35, 1
        %s723 = scalar_select %p722, %s35, 1
        %s724 = smul.addr %s723, 16
        %s725 = smul.addr %s724, 4
        %s726 = scalar_lea.vmem %s3, %s725
        %p727 = scmp.lt.s32.totalorder %s35, 1
        %s728 = scalar_select %p727, %s35, 1
        %s729 = smul.addr %s728, 16
        %s730 = smul.addr %s729, 4
        %s731 = scalar_lea.vmem %s4, %s730
        %p732 = scmp.lt.s32.totalorder %s35, 1
        %s733 = scalar_select %p732, %s35, 1
        %s734 = smul.addr %s733, 16
        %s735 = smul.addr %s734, 4
        %s736 = scalar_lea.vmem %s5, %s735
        %p737 = scmp.lt.s32.totalorder %s35, 1
        %s738 = scalar_select %p737, %s35, 1
        %s739 = scalar_lea.vmem %s6, %s738
        %p740 = scmp.lt.s32.totalorder %s35, 1
        %s741 = scalar_select %p740, %s35, 1
        %s742 = scalar_lea.vmem %s7, %s741
        %p743 = scmp.lt.s32.totalorder %s35, 1
        %s744 = scalar_select %p743, %s35, 1
        %s745 = scalar_lea.vmem %s8, %s744
        %p746 = scmp.lt.s32.totalorder %s35, 1
        %s747 = scalar_select %p746, %s35, 1
        %s748 = scalar_lea.vmem %s9, %s747
        %p749 = scmp.lt.s32.totalorder %s35, 1
        %s750 = scalar_select %p749, %s35, 1
        %s751 = smul.addr %s750, 4
        %s752 = smul.addr %s751, 4
        %s753 = scalar_lea.vmem %s10, %s752
        %p754 = scmp.lt.s32.totalorder %s35, 1
        %s755 = scalar_select %p754, %s35, 1
        %s756 = scalar_lea.vmem %s11, %s755
        %p757 = scmp.lt.s32.totalorder %s35, 1
        %s758 = scalar_select %p757, %s35, 1
        %s759 = smul.addr %s758, 8
        %s760 = smul.addr %s759, 4
        %s761 = scalar_lea.vmem %s12, %s760
        %p762 = scmp.lt.s32.totalorder %s35, 1
        %s763 = scalar_select %p762, %s35, 1
        %s764 = scalar_lea.vmem %s13, %s763
        %s765 = smul.u32 2, %s34
        %p767 = scmp.eq.s32.totalorder %s35, 0
        // Predicated region
        $region93: #{decode_transformer.1} parent=91 // pred_check
          %p768 = pneg %p767
        $region94: #{decode_transformer.1} parent=91 // pred_check_branch
          %770 = sbr.rel (%p768) target = $region96
        $region95: #{decode_transformer.1} parent=91 // pred_region
          %v771 = vld [vmem:[%s720] sm:$0xff]
          %v772 = vld [vmem:[%s720 + $0x8] sm:$0xff]
          %v773 = vpack.c.bf16 %v772, %v771
          %v774 = vld [vmem:[%s2] sm:$0xf]
          %v775 = vld [vmem:[%s2 + $0x4] sm:$0xf]
          %v776 = vld [vmem:[%s1] sm:$0xff]
          %v777 = vld [vmem:[%s1 + $0x8] sm:$0xff]
          %v780 = vunpack.c.l.b16 %v774
          %v781 = vunpack.c.l.b16 %v775
          %v782 = vpack.c.b16 %v781, %v780
          %vm784 = vcmask 130048
          %v786 = vsel %vm784, %v773, 0
          %788 = vmatpush.bf16.msra.mxu0 0
          %789 = vmatpush.bf16.msra.mxu0 0
          %790 = vmatpush.bf16.msra.mxu0 0
          %791 = vmatpush.bf16.msra.mxu0 0
          %792 = vmatpush.bf16.msra.mxu0 0
          %793 = vmatpush.bf16.msra.mxu0 0
          %794 = vmatpush.bf16.msra.mxu0 0
          %795 = vmatpush.bf16.msra.mxu0 %v782
          %796 = vmatmul.bf16.gmra.mxu0 %v786
          %v797 = vpop.f32.mrf.mxu0
          %v798 = vadd.f32 %v776, %v797
          %v799 = vpop.f32.mrf.mxu0
          %v800 = vadd.f32 %v777, %v799
          %801 = vdwg.mxu0
          %vm802 = vcmask 261120
          %803 = vst.msk [vmem:[#allocation2] sm:$0xff] %vm802, %v798
          %804 = vst.msk [vmem:[#allocation2 + $0x8] sm:$0xff] %vm802, %v800
        $region96: #{decode_transformer.1} parent=91 // pred_fallthru
          _
        %v805 = vld [vmem:[#allocation2] sm:$0xff]
        %v806 = vld [vmem:[#allocation2 + $0x8] sm:$0xff]
        %v807 = vld [vmem:[%s739] sm:$0x1]
        %v808 = vld [vmem:[%s742] sm:$0x1]
        %vm809 = vcmask 261120
        %v810 = vsel %vm809, %v805, 0.0
        %811 = vadd.xlane.f32.xlu0 %v810
        %v812 = vpop.xlane.xlu0 %811
        %v813 = vsel %vm809, %v806, 0.0
        %814 = vadd.xlane.f32.xlu0 %v813
        %v815 = vpop.xlane.xlu0 %814
        %v816 = vrcp.pop 32.0
        %v817 = vmul.f32 32.0, %v816
        %v818 = vsub.f32 1.0, %v817
        %v819 = vmul.f32 %v816, %v818
        %v820 = vadd.f32 %v816, %v819
        %vm821 = vweird.f32 %v816
        %v822 = vsel %vm821, %v816, %v820
        %v823 = vmul.f32 %v812, %v822
        %v824 = vmul.f32 %v815, %v822
        %v825 = vsub.f32 %v805, %v823
        %v826 = vsub.f32 %v806, %v824
        %v827 = vmul.f32 %v825, %v825
        %v828 = vmul.f32 %v826, %v826
        %v829 = vsel %vm809, %v827, 0.0
        %830 = vadd.xlane.f32.xlu0 %v829
        %v831 = vpop.xlane.xlu0 %830
        %v832 = vsel %vm809, %v828, 0.0
        %833 = vadd.xlane.f32.xlu0 %v832
        %v834 = vpop.xlane.xlu0 %833
        %v835 = vmul.f32 %v831, %v822
        %v836 = vmul.f32 %v834, %v822
        %v837 = vadd.f32 %v835, 1e-05
        %v838 = vadd.f32 %v836, 1e-05
        %v839 = vrsqrt.pop %v837
        %v840 = vmul.f32 %v839, %v837
        %v841 = vmul.f32 %v840, %v839
        %v842 = vmul.f32 0.5, %v841
        %v843 = vsub.f32 1.5, %v842
        %v844 = vmul.f32 %v839, %v843
        %vm845 = vweird.f32 %v837
        %vm846 = vweird.f32 %v839
        %vm847 = vmor %vm845, %vm846
        %v848 = vsel %vm847, %v839, %v844
        %v849 = vrsqrt.pop %v838
        %v850 = vmul.f32 %v849, %v838
        %v851 = vmul.f32 %v850, %v849
        %v852 = vmul.f32 0.5, %v851
        %v853 = vsub.f32 1.5, %v852
        %v854 = vmul.f32 %v849, %v853
        %vm855 = vweird.f32 %v838
        %vm856 = vweird.f32 %v849
        %vm857 = vmor %vm855, %vm856
        %v858 = vsel %vm857, %v849, %v854
        %v859 = vmul.f32 %v825, %v848
        %v860 = vmul.f32 %v826, %v858
        %v862 = vperm.slane %v807, 0
        %v864 = vmul.f32 %v859, %v862
        %v865 = vmul.f32 %v860, %v862
        %v867 = vperm.slane %v808, 0
        %v869 = vadd.f32 %v864, %v867
        %v870 = vadd.f32 %v865, %v867
        %v871 = vpack.c.bf16 %v870, %v869
        %v872 = vlaneseq
        %v873 = vshrl.u32 %v872, 7
        %v874 = vlaneseq
        %v875 = vand.u32 %v874, 127
        %vm876 = vcmp.le.s32.totalorder %v875, %v873
        %v877 = vld [vmem:[%s726] sm:$0xf]
        %v878 = vld [vmem:[%s726 + $0x4] sm:$0xf]
        %v879 = vld [vmem:[%s726 + $0x8] sm:$0xf]
        %v880 = vld [vmem:[%s726 + $0xc] sm:$0xf]
        %v885 = vunpack.c.l.b16 %v877
        %v886 = vunpack.c.l.b16 %v878
        %v887 = vunpack.c.l.b16 %v879
        %v888 = vunpack.c.l.b16 %v880
        %v889 = vpack.c.b16 %v886, %v885
        %v890 = vpack.c.b16 %v888, %v887
        %v894 = vsel %vm809, %v871, 0
        %896 = vmatpush.bf16.msra.mxu0 0
        %897 = vmatpush.bf16.msra.mxu0 0
        %898 = vmatpush.bf16.msra.mxu0 0
        %899 = vmatpush.bf16.msra.mxu0 0
        %900 = vmatpush.bf16.msra.mxu0 0
        %901 = vmatpush.bf16.msra.mxu0 0
        %902 = vmatpush.bf16.msra.mxu0 %v890
        %903 = vmatpush.bf16.msra.mxu0 %v889
        %904 = vmatmul.bf16.gmra.mxu0 %v894
        %v905 = vpop.f32.mrf.mxu0
        %v906 = vadd.f32 0.0, %v905
        %v907 = vpop.f32.mrf.mxu0
        %v908 = vadd.f32 0.0, %v907
        %909 = vdwg.mxu0
        %v910 = vmul.f32 %v906, 0.35355338
        %v911 = vmul.f32 %v908, 0.35355338
        %v912 = vld [vmem:[%s731] sm:$0xf]
        %v913 = vld [vmem:[%s731 + $0x4] sm:$0xf]
        %v914 = vld [vmem:[%s731 + $0x8] sm:$0xf]
        %v915 = vld [vmem:[%s731 + $0xc] sm:$0xf]
        %v920 = vunpack.c.l.b16 %v912
        %v921 = vunpack.c.l.b16 %v913
        %v922 = vunpack.c.l.b16 %v914
        %v923 = vunpack.c.l.b16 %v915
        %v924 = vpack.c.b16 %v921, %v920
        %v925 = vpack.c.b16 %v923, %v922
        %928 = vmatpush.bf16.msra.mxu0 0
        %929 = vmatpush.bf16.msra.mxu0 0
        %930 = vmatpush.bf16.msra.mxu0 0
        %931 = vmatpush.bf16.msra.mxu0 0
        %932 = vmatpush.bf16.msra.mxu0 0
        %933 = vmatpush.bf16.msra.mxu0 0
        %934 = vmatpush.bf16.msra.mxu0 %v925
        %935 = vmatpush.bf16.msra.mxu0 %v924
        %936 = vmatmul.bf16.gmra.mxu0 %v894
        %v937 = vpop.f32.mrf.mxu0
        %v938 = vadd.f32 0.0, %v937
        %v939 = vpop.f32.mrf.mxu0
        %v940 = vadd.f32 0.0, %v939
        %941 = vdwg.mxu0
        %v942 = vld [vmem:[%s736] sm:$0xf]
        %v943 = vld [vmem:[%s736 + $0x4] sm:$0xf]
        %v944 = vld [vmem:[%s736 + $0x8] sm:$0xf]
        %v945 = vld [vmem:[%s736 + $0xc] sm:$0xf]
        %v950 = vunpack.c.l.b16 %v942
        %v951 = vunpack.c.l.b16 %v943
        %v952 = vunpack.c.l.b16 %v944
        %v953 = vunpack.c.l.b16 %v945
        %v954 = vpack.c.b16 %v951, %v950
        %v955 = vpack.c.b16 %v953, %v952
        %958 = vmatpush.bf16.msra.mxu0 0
        %959 = vmatpush.bf16.msra.mxu0 0
        %960 = vmatpush.bf16.msra.mxu0 0
        %961 = vmatpush.bf16.msra.mxu0 0
        %962 = vmatpush.bf16.msra.mxu0 0
        %963 = vmatpush.bf16.msra.mxu0 0
        %964 = vmatpush.bf16.msra.mxu0 %v955
        %965 = vmatpush.bf16.msra.mxu0 %v954
        %966 = vmatmul.bf16.gmra.mxu0 %v894
        %v967 = vpop.f32.mrf.mxu0
        %v968 = vadd.f32 0.0, %v967
        %v969 = vpop.f32.mrf.mxu0
        %v970 = vadd.f32 0.0, %v969
        %971 = vdwg.mxu0
        %vm972 = vcmask 64512
        %v974 = vsel %vm972, %v910, 0
        %v977 = vsel %vm972, %v938, 0
        %979 = vmatpush.xpose.msra.mxu0 0.0
        %980 = vmatpush.xpose.msra.mxu0 0.0
        %981 = vmatpush.xpose.msra.mxu0 0.0
        %982 = vmatpush.xpose.msra.mxu0 0.0
        %983 = vmatpush.xpose.msra.mxu0 0.0
        %984 = vmatpush.xpose.msra.mxu0 0.0
        %985 = vmatpush.xpose.msra.mxu0 0.0
        %986 = vmatpush.xpose.msra.mxu0 0.0
        %987 = vmatpush.xpose.msra.mxu0 0.0
        %988 = vmatpush.xpose.msra.mxu0 0.0
        %989 = vmatpush.xpose.msra.mxu0 0.0
        %990 = vmatpush.xpose.msra.mxu0 0.0
        %991 = vmatpush.xpose.msra.mxu0 0.0
        %992 = vmatpush.xpose.msra.mxu0 0.0
        %993 = vmatpush.xpose.msra.mxu0 0.0
        %994 = vmatpush.xpose.msra.mxu0 %v977
        %995 = vmatmul.f32.gmra.mxu0 %v974
        %v996 = vpop.f32.mrf.mxu0
        %v997 = vadd.f32 0.0, %v996
        %998 = vdwg.mxu0
        %v1000 = vsel %vm972, %v911, 0
        %v1003 = vsel %vm972, %v940, 0
        %1005 = vmatpush.xpose.msra.mxu0 0.0
        %1006 = vmatpush.xpose.msra.mxu0 0.0
        %1007 = vmatpush.xpose.msra.mxu0 0.0
        %1008 = vmatpush.xpose.msra.mxu0 0.0
        %1009 = vmatpush.xpose.msra.mxu0 0.0
        %1010 = vmatpush.xpose.msra.mxu0 0.0
        %1011 = vmatpush.xpose.msra.mxu0 0.0
        %1012 = vmatpush.xpose.msra.mxu0 0.0
        %1013 = vmatpush.xpose.msra.mxu0 0.0
        %1014 = vmatpush.xpose.msra.mxu0 0.0
        %1015 = vmatpush.xpose.msra.mxu0 0.0
        %1016 = vmatpush.xpose.msra.mxu0 0.0
        %1017 = vmatpush.xpose.msra.mxu0 0.0
        %1018 = vmatpush.xpose.msra.mxu0 0.0
        %1019 = vmatpush.xpose.msra.mxu0 0.0
        %1020 = vmatpush.xpose.msra.mxu0 %v1003
        %1021 = vmatmul.f32.gmra.mxu0 %v1000
        %v1022 = vpop.f32.mrf.mxu0
        %v1023 = vadd.f32 0.0, %v1022
        %1024 = vdwg.mxu0
        %v1025 = vsel %vm876, 1, 0
        %vm1026 = vcmp.eq.s32.totalorder %v1025, 1
        %v1027 = vsel %vm1026, %v997, -inf
        %v1028 = vsel %vm1026, %v1023, -inf
        %v1029 = vsel %vm972, %v1027, -inf
        %1030 = vmax.xlane.f32.xlu0 %v1029
        %v1031 = vpop.xlane.xlu0 %1030
        %v1032 = vsel %vm972, %v1028, -inf
        %1033 = vmax.xlane.f32.xlu0 %v1032
        %v1034 = vpop.xlane.xlu0 %1033
        %v1035 = vsub.f32 %v1027, %v1031
        %v1036 = vsub.f32 %v1028, %v1034
        %v1037 = vmul.f32 %v1035, 1.442695
        %v1038 = vpow.pop %v1037
        %v1039 = vmul.f32 %v1036, 1.442695
        %v1040 = vpow.pop %v1039
        %v1041 = vsel %vm972, %v1038, 0.0
        %1042 = vadd.xlane.f32.xlu0 %v1041
        %v1043 = vpop.xlane.xlu0 %1042
        %v1044 = vsel %vm972, %v1040, 0.0
        %1045 = vadd.xlane.f32.xlu0 %v1044
        %v1046 = vpop.xlane.xlu0 %1045
        %v1047 = vrcp.pop %v1043
        %v1048 = vrcp.pop %v1046
        %v1049 = vmul.f32 %v1038, %v1047
        %v1050 = vmul.f32 %v1040, %v1048
        %v1052 = vsel %vm972, %v1049, 0
        %1054 = vmatpush.msra.mxu0 0.0
        %1055 = vmatpush.msra.mxu0 0.0
        %1056 = vmatpush.msra.mxu0 0.0
        %1057 = vmatpush.msra.mxu0 0.0
        %1058 = vmatpush.msra.mxu0 0.0
        %1059 = vmatpush.msra.mxu0 0.0
        %1060 = vmatpush.msra.mxu0 0.0
        %1061 = vmatpush.msra.mxu0 0.0
        %1062 = vmatpush.msra.mxu0 0.0
        %1063 = vmatpush.msra.mxu0 0.0
        %1064 = vmatpush.msra.mxu0 0.0
        %1065 = vmatpush.msra.mxu0 0.0
        %1066 = vmatpush.msra.mxu0 0.0
        %1067 = vmatpush.msra.mxu0 0.0
        %1068 = vmatpush.msra.mxu0 0.0
        %1069 = vmatpush.msra.mxu0 %v968
        %1070 = vmatmul.f32.gmra.mxu0 %v1052
        %v1071 = vpop.f32.mrf.mxu0
        %v1072 = vadd.f32 0.0, %v1071
        %1073 = vdwg.mxu0
        %v1075 = vsel %vm972, %v1050, 0
        %1077 = vmatpush.msra.mxu0 0.0
        %1078 = vmatpush.msra.mxu0 0.0
        %1079 = vmatpush.msra.mxu0 0.0
        %1080 = vmatpush.msra.mxu0 0.0
        %1081 = vmatpush.msra.mxu0 0.0
        %1082 = vmatpush.msra.mxu0 0.0
        %1083 = vmatpush.msra.mxu0 0.0
        %1084 = vmatpush.msra.mxu0 0.0
        %1085 = vmatpush.msra.mxu0 0.0
        %1086 = vmatpush.msra.mxu0 0.0
        %1087 = vmatpush.msra.mxu0 0.0
        %1088 = vmatpush.msra.mxu0 0.0
        %1089 = vmatpush.msra.mxu0 0.0
        %1090 = vmatpush.msra.mxu0 0.0
        %1091 = vmatpush.msra.mxu0 0.0
        %1092 = vmatpush.msra.mxu0 %v970
        %1093 = vmatmul.f32.gmra.mxu0 %v1075
        %v1094 = vpop.f32.mrf.mxu0
        %v1095 = vadd.f32 0.0, %v1094
        %1096 = vdwg.mxu0
        %1097 = vst.msk [vmem:[#allocation3] sm:$0xff] %vm972, %v1072
        %1098 = vst.msk [vmem:[#allocation3 + $0x8] sm:$0xff] %vm972, %v1095
        %s1099 = scalar_lea.vmem %s726, 16
        %v1100 = vld [vmem:[%s1099] sm:$0xf]
        %v1101 = vld [vmem:[%s1099 + $0x4] sm:$0xf]
        %v1102 = vld [vmem:[%s1099 + $0x8] sm:$0xf]
        %v1103 = vld [vmem:[%s1099 + $0xc] sm:$0xf]
        %v1108 = vunpack.c.l.b16 %v1100
        %v1109 = vunpack.c.l.b16 %v1101
        %v1110 = vunpack.c.l.b16 %v1102
        %v1111 = vunpack.c.l.b16 %v1103
        %v1112 = vpack.c.b16 %v1109, %v1108
        %v1113 = vpack.c.b16 %v1111, %v1110
        %1116 = vmatpush.bf16.msra.mxu0 0
        %1117 = vmatpush.bf16.msra.mxu0 0
        %1118 = vmatpush.bf16.msra.mxu0 0
        %1119 = vmatpush.bf16.msra.mxu0 0
        %1120 = vmatpush.bf16.msra.mxu0 0
        %1121 = vmatpush.bf16.msra.mxu0 0
        %1122 = vmatpush.bf16.msra.mxu0 %v1113
        %1123 = vmatpush.bf16.msra.mxu0 %v1112
        %1124 = vmatmul.bf16.gmra.mxu0 %v894
        %v1125 = vpop.f32.mrf.mxu0
        %v1126 = vadd.f32 0.0, %v1125
        %v1127 = vpop.f32.mrf.mxu0
        %v1128 = vadd.f32 0.0, %v1127
        %1129 = vdwg.mxu0
        %v1130 = vmul.f32 %v1126, 0.35355338
        %v1131 = vmul.f32 %v1128, 0.35355338
        %s1132 = scalar_lea.vmem %s731, 16
        %v1133 = vld [vmem:[%s1132] sm:$0xf]
        %v1134 = vld [vmem:[%s1132 + $0x4] sm:$0xf]
        %v1135 = vld [vmem:[%s1132 + $0x8] sm:$0xf]
        %v1136 = vld [vmem:[%s1132 + $0xc] sm:$0xf]
        %v1141 = vunpack.c.l.b16 %v1133
        %v1142 = vunpack.c.l.b16 %v1134
        %v1143 = vunpack.c.l.b16 %v1135
        %v1144 = vunpack.c.l.b16 %v1136
        %v1145 = vpack.c.b16 %v1142, %v1141
        %v1146 = vpack.c.b16 %v1144, %v1143
        %1149 = vmatpush.bf16.msra.mxu0 0
        %1150 = vmatpush.bf16.msra.mxu0 0
        %1151 = vmatpush.bf16.msra.mxu0 0
        %1152 = vmatpush.bf16.msra.mxu0 0
        %1153 = vmatpush.bf16.msra.mxu0 0
        %1154 = vmatpush.bf16.msra.mxu0 0
        %1155 = vmatpush.bf16.msra.mxu0 %v1146
        %1156 = vmatpush.bf16.msra.mxu0 %v1145
        %1157 = vmatmul.bf16.gmra.mxu0 %v894
        %v1158 = vpop.f32.mrf.mxu0
        %v1159 = vadd.f32 0.0, %v1158
        %v1160 = vpop.f32.mrf.mxu0
        %v1161 = vadd.f32 0.0, %v1160
        %1162 = vdwg.mxu0
        %s1163 = scalar_lea.vmem %s736, 16
        %v1164 = vld [vmem:[%s1163] sm:$0xf]
        %v1165 = vld [vmem:[%s1163 + $0x4] sm:$0xf]
        %v1166 = vld [vmem:[%s1163 + $0x8] sm:$0xf]
        %v1167 = vld [vmem:[%s1163 + $0xc] sm:$0xf]
        %v1172 = vunpack.c.l.b16 %v1164
        %v1173 = vunpack.c.l.b16 %v1165
        %v1174 = vunpack.c.l.b16 %v1166
        %v1175 = vunpack.c.l.b16 %v1167
        %v1176 = vpack.c.b16 %v1173, %v1172
        %v1177 = vpack.c.b16 %v1175, %v1174
        %1180 = vmatpush.bf16.msra.mxu0 0
        %1181 = vmatpush.bf16.msra.mxu0 0
        %1182 = vmatpush.bf16.msra.mxu0 0
        %1183 = vmatpush.bf16.msra.mxu0 0
        %1184 = vmatpush.bf16.msra.mxu0 0
        %1185 = vmatpush.bf16.msra.mxu0 0
        %1186 = vmatpush.bf16.msra.mxu0 %v1177
        %1187 = vmatpush.bf16.msra.mxu0 %v1176
        %1188 = vmatmul.bf16.gmra.mxu0 %v894
        %v1189 = vpop.f32.mrf.mxu0
        %v1190 = vadd.f32 0.0, %v1189
        %v1191 = vpop.f32.mrf.mxu0
        %v1192 = vadd.f32 0.0, %v1191
        %1193 = vdwg.mxu0
        %v1195 = vsel %vm972, %v1130, 0
        %v1198 = vsel %vm972, %v1159, 0
        %1200 = vmatpush.xpose.msra.mxu0 0.0
        %1201 = vmatpush.xpose.msra.mxu0 0.0
        %1202 = vmatpush.xpose.msra.mxu0 0.0
        %1203 = vmatpush.xpose.msra.mxu0 0.0
        %1204 = vmatpush.xpose.msra.mxu0 0.0
        %1205 = vmatpush.xpose.msra.mxu0 0.0
        %1206 = vmatpush.xpose.msra.mxu0 0.0
        %1207 = vmatpush.xpose.msra.mxu0 0.0
        %1208 = vmatpush.xpose.msra.mxu0 0.0
        %1209 = vmatpush.xpose.msra.mxu0 0.0
        %1210 = vmatpush.xpose.msra.mxu0 0.0
        %1211 = vmatpush.xpose.msra.mxu0 0.0
        %1212 = vmatpush.xpose.msra.mxu0 0.0
        %1213 = vmatpush.xpose.msra.mxu0 0.0
        %1214 = vmatpush.xpose.msra.mxu0 0.0
        %1215 = vmatpush.xpose.msra.mxu0 %v1198
        %1216 = vmatmul.f32.gmra.mxu0 %v1195
        %v1217 = vpop.f32.mrf.mxu0
        %v1218 = vadd.f32 0.0, %v1217
        %1219 = vdwg.mxu0
        %v1221 = vsel %vm972, %v1131, 0
        %v1224 = vsel %vm972, %v1161, 0
        %1226 = vmatpush.xpose.msra.mxu0 0.0
        %1227 = vmatpush.xpose.msra.mxu0 0.0
        %1228 = vmatpush.xpose.msra.mxu0 0.0
        %1229 = vmatpush.xpose.msra.mxu0 0.0
        %1230 = vmatpush.xpose.msra.mxu0 0.0
        %1231 = vmatpush.xpose.msra.mxu0 0.0
        %1232 = vmatpush.xpose.msra.mxu0 0.0
        %1233 = vmatpush.xpose.msra.mxu0 0.0
        %1234 = vmatpush.xpose.msra.mxu0 0.0
        %1235 = vmatpush.xpose.msra.mxu0 0.0
        %1236 = vmatpush.xpose.msra.mxu0 0.0
        %1237 = vmatpush.xpose.msra.mxu0 0.0
        %1238 = vmatpush.xpose.msra.mxu0 0.0
        %1239 = vmatpush.xpose.msra.mxu0 0.0
        %1240 = vmatpush.xpose.msra.mxu0 0.0
        %1241 = vmatpush.xpose.msra.mxu0 %v1224
        %1242 = vmatmul.f32.gmra.mxu0 %v1221
        %v1243 = vpop.f32.mrf.mxu0
        %v1244 = vadd.f32 0.0, %v1243
        %1245 = vdwg.mxu0
        %v1246 = vsel %vm1026, %v1218, -inf
        %v1247 = vsel %vm1026, %v1244, -inf
        %v1248 = vsel %vm972, %v1246, -inf
        %1249 = vmax.xlane.f32.xlu0 %v1248
        %v1250 = vpop.xlane.xlu0 %1249
        %v1251 = vsel %vm972, %v1247, -inf
        %1252 = vmax.xlane.f32.xlu0 %v1251
        %v1253 = vpop.xlane.xlu0 %1252
        %v1254 = vsub.f32 %v1246, %v1250
        %v1255 = vsub.f32 %v1247, %v1253
        %v1256 = vmul.f32 %v1254, 1.442695
        %v1257 = vpow.pop %v1256
        %v1258 = vmul.f32 %v1255, 1.442695
        %v1259 = vpow.pop %v1258
        %v1260 = vsel %vm972, %v1257, 0.0
        %1261 = vadd.xlane.f32.xlu0 %v1260
        %v1262 = vpop.xlane.xlu0 %1261
        %v1263 = vsel %vm972, %v1259, 0.0
        %1264 = vadd.xlane.f32.xlu0 %v1263
        %v1265 = vpop.xlane.xlu0 %1264
        %v1266 = vrcp.pop %v1262
        %v1267 = vrcp.pop %v1265
        %v1268 = vmul.f32 %v1257, %v1266
        %v1269 = vmul.f32 %v1259, %v1267
        %v1271 = vsel %vm972, %v1268, 0
        %1273 = vmatpush.msra.mxu0 0.0
        %1274 = vmatpush.msra.mxu0 0.0
        %1275 = vmatpush.msra.mxu0 0.0
        %1276 = vmatpush.msra.mxu0 0.0
        %1277 = vmatpush.msra.mxu0 0.0
        %1278 = vmatpush.msra.mxu0 0.0
        %1279 = vmatpush.msra.mxu0 0.0
        %1280 = vmatpush.msra.mxu0 0.0
        %1281 = vmatpush.msra.mxu0 0.0
        %1282 = vmatpush.msra.mxu0 0.0
        %1283 = vmatpush.msra.mxu0 0.0
        %1284 = vmatpush.msra.mxu0 0.0
        %1285 = vmatpush.msra.mxu0 0.0
        %1286 = vmatpush.msra.mxu0 0.0
        %1287 = vmatpush.msra.mxu0 0.0
        %1288 = vmatpush.msra.mxu0 %v1190
        %1289 = vmatmul.f32.gmra.mxu0 %v1271
        %v1290 = vpop.f32.mrf.mxu0
        %v1291 = vadd.f32 0.0, %v1290
        %1292 = vdwg.mxu0
        %v1294 = vsel %vm972, %v1269, 0
        %1296 = vmatpush.msra.mxu0 0.0
        %1297 = vmatpush.msra.mxu0 0.0
        %1298 = vmatpush.msra.mxu0 0.0
        %1299 = vmatpush.msra.mxu0 0.0
        %1300 = vmatpush.msra.mxu0 0.0
        %1301 = vmatpush.msra.mxu0 0.0
        %1302 = vmatpush.msra.mxu0 0.0
        %1303 = vmatpush.msra.mxu0 0.0
        %1304 = vmatpush.msra.mxu0 0.0
        %1305 = vmatpush.msra.mxu0 0.0
        %1306 = vmatpush.msra.mxu0 0.0
        %1307 = vmatpush.msra.mxu0 0.0
        %1308 = vmatpush.msra.mxu0 0.0
        %1309 = vmatpush.msra.mxu0 0.0
        %1310 = vmatpush.msra.mxu0 0.0
        %1311 = vmatpush.msra.mxu0 %v1192
        %1312 = vmatmul.f32.gmra.mxu0 %v1294
        %v1313 = vpop.f32.mrf.mxu0
        %v1314 = vadd.f32 0.0, %v1313
        %1315 = vdwg.mxu0
        %1318 = vrot.lane.b32.xlu0 %v1291, 8
        %v1319 = vpop.permute.xlu0 %1318
        %1320 = vrot.lane.b32.xlu0 %v1314, 8
        %v1321 = vpop.permute.xlu0 %1320
        %vm1324 = vcmask 130112
        %1325 = vst.msk [vmem:[#allocation3] sm:$0xff] %vm1324, %v1319
        %1326 = vst.msk [vmem:[#allocation3 + $0x8] sm:$0xff] %vm1324, %v1321
        %s1327 = scalar_lea.vmem %s726, 32
        %v1328 = vld [vmem:[%s1327] sm:$0xf]
        %v1329 = vld [vmem:[%s1327 + $0x4] sm:$0xf]
        %v1330 = vld [vmem:[%s1327 + $0x8] sm:$0xf]
        %v1331 = vld [vmem:[%s1327 + $0xc] sm:$0xf]
        %v1336 = vunpack.c.l.b16 %v1328
        %v1337 = vunpack.c.l.b16 %v1329
        %v1338 = vunpack.c.l.b16 %v1330
        %v1339 = vunpack.c.l.b16 %v1331
        %v1340 = vpack.c.b16 %v1337, %v1336
        %v1341 = vpack.c.b16 %v1339, %v1338
        %1344 = vmatpush.bf16.msra.mxu0 0
        %1345 = vmatpush.bf16.msra.mxu0 0
        %1346 = vmatpush.bf16.msra.mxu0 0
        %1347 = vmatpush.bf16.msra.mxu0 0
        %1348 = vmatpush.bf16.msra.mxu0 0
        %1349 = vmatpush.bf16.msra.mxu0 0
        %1350 = vmatpush.bf16.msra.mxu0 %v1341
        %1351 = vmatpush.bf16.msra.mxu0 %v1340
        %1352 = vmatmul.bf16.gmra.mxu0 %v894
        %v1353 = vpop.f32.mrf.mxu0
        %v1354 = vadd.f32 0.0, %v1353
        %v1355 = vpop.f32.mrf.mxu0
        %v1356 = vadd.f32 0.0, %v1355
        %1357 = vdwg.mxu0
        %v1358 = vmul.f32 %v1354, 0.35355338
        %v1359 = vmul.f32 %v1356, 0.35355338
        %s1360 = scalar_lea.vmem %s731, 32
        %v1361 = vld [vmem:[%s1360] sm:$0xf]
        %v1362 = vld [vmem:[%s1360 + $0x4] sm:$0xf]
        %v1363 = vld [vmem:[%s1360 + $0x8] sm:$0xf]
        %v1364 = vld [vmem:[%s1360 + $0xc] sm:$0xf]
        %v1369 = vunpack.c.l.b16 %v1361
        %v1370 = vunpack.c.l.b16 %v1362
        %v1371 = vunpack.c.l.b16 %v1363
        %v1372 = vunpack.c.l.b16 %v1364
        %v1373 = vpack.c.b16 %v1370, %v1369
        %v1374 = vpack.c.b16 %v1372, %v1371
        %1377 = vmatpush.bf16.msra.mxu0 0
        %1378 = vmatpush.bf16.msra.mxu0 0
        %1379 = vmatpush.bf16.msra.mxu0 0
        %1380 = vmatpush.bf16.msra.mxu0 0
        %1381 = vmatpush.bf16.msra.mxu0 0
        %1382 = vmatpush.bf16.msra.mxu0 0
        %1383 = vmatpush.bf16.msra.mxu0 %v1374
        %1384 = vmatpush.bf16.msra.mxu0 %v1373
        %1385 = vmatmul.bf16.gmra.mxu0 %v894
        %v1386 = vpop.f32.mrf.mxu0
        %v1387 = vadd.f32 0.0, %v1386
        %v1388 = vpop.f32.mrf.mxu0
        %v1389 = vadd.f32 0.0, %v1388
        %1390 = vdwg.mxu0
        %s1391 = scalar_lea.vmem %s736, 32
        %v1392 = vld [vmem:[%s1391] sm:$0xf]
        %v1393 = vld [vmem:[%s1391 + $0x4] sm:$0xf]
        %v1394 = vld [vmem:[%s1391 + $0x8] sm:$0xf]
        %v1395 = vld [vmem:[%s1391 + $0xc] sm:$0xf]
        %v1400 = vunpack.c.l.b16 %v1392
        %v1401 = vunpack.c.l.b16 %v1393
        %v1402 = vunpack.c.l.b16 %v1394
        %v1403 = vunpack.c.l.b16 %v1395
        %v1404 = vpack.c.b16 %v1401, %v1400
        %v1405 = vpack.c.b16 %v1403, %v1402
        %1408 = vmatpush.bf16.msra.mxu0 0
        %1409 = vmatpush.bf16.msra.mxu0 0
        %1410 = vmatpush.bf16.msra.mxu0 0
        %1411 = vmatpush.bf16.msra.mxu0 0
        %1412 = vmatpush.bf16.msra.mxu0 0
        %1413 = vmatpush.bf16.msra.mxu0 0
        %1414 = vmatpush.bf16.msra.mxu0 %v1405
        %1415 = vmatpush.bf16.msra.mxu0 %v1404
        %1416 = vmatmul.bf16.gmra.mxu0 %v894
        %v1417 = vpop.f32.mrf.mxu0
        %v1418 = vadd.f32 0.0, %v1417
        %v1419 = vpop.f32.mrf.mxu0
        %v1420 = vadd.f32 0.0, %v1419
        %1421 = vdwg.mxu0
        %v1423 = vsel %vm972, %v1358, 0
        %v1426 = vsel %vm972, %v1387, 0
        %1428 = vmatpush.xpose.msra.mxu0 0.0
        %1429 = vmatpush.xpose.msra.mxu0 0.0
        %1430 = vmatpush.xpose.msra.mxu0 0.0
        %1431 = vmatpush.xpose.msra.mxu0 0.0
        %1432 = vmatpush.xpose.msra.mxu0 0.0
        %1433 = vmatpush.xpose.msra.mxu0 0.0
        %1434 = vmatpush.xpose.msra.mxu0 0.0
        %1435 = vmatpush.xpose.msra.mxu0 0.0
        %1436 = vmatpush.xpose.msra.mxu0 0.0
        %1437 = vmatpush.xpose.msra.mxu0 0.0
        %1438 = vmatpush.xpose.msra.mxu0 0.0
        %1439 = vmatpush.xpose.msra.mxu0 0.0
        %1440 = vmatpush.xpose.msra.mxu0 0.0
        %1441 = vmatpush.xpose.msra.mxu0 0.0
        %1442 = vmatpush.xpose.msra.mxu0 0.0
        %1443 = vmatpush.xpose.msra.mxu0 %v1426
        %1444 = vmatmul.f32.gmra.mxu0 %v1423
        %v1445 = vpop.f32.mrf.mxu0
        %v1446 = vadd.f32 0.0, %v1445
        %1447 = vdwg.mxu0
        %v1449 = vsel %vm972, %v1359, 0
        %v1452 = vsel %vm972, %v1389, 0
        %1454 = vmatpush.xpose.msra.mxu0 0.0
        %1455 = vmatpush.xpose.msra.mxu0 0.0
        %1456 = vmatpush.xpose.msra.mxu0 0.0
        %1457 = vmatpush.xpose.msra.mxu0 0.0
        %1458 = vmatpush.xpose.msra.mxu0 0.0
        %1459 = vmatpush.xpose.msra.mxu0 0.0
        %1460 = vmatpush.xpose.msra.mxu0 0.0
        %1461 = vmatpush.xpose.msra.mxu0 0.0
        %1462 = vmatpush.xpose.msra.mxu0 0.0
        %1463 = vmatpush.xpose.msra.mxu0 0.0
        %1464 = vmatpush.xpose.msra.mxu0 0.0
        %1465 = vmatpush.xpose.msra.mxu0 0.0
        %1466 = vmatpush.xpose.msra.mxu0 0.0
        %1467 = vmatpush.xpose.msra.mxu0 0.0
        %1468 = vmatpush.xpose.msra.mxu0 0.0
        %1469 = vmatpush.xpose.msra.mxu0 %v1452
        %1470 = vmatmul.f32.gmra.mxu0 %v1449
        %v1471 = vpop.f32.mrf.mxu0
        %v1472 = vadd.f32 0.0, %v1471
        %1473 = vdwg.mxu0
        %v1474 = vsel %vm1026, %v1446, -inf
        %v1475 = vsel %vm1026, %v1472, -inf
        %v1476 = vsel %vm972, %v1474, -inf
        %1477 = vmax.xlane.f32.xlu0 %v1476
        %v1478 = vpop.xlane.xlu0 %1477
        %v1479 = vsel %vm972, %v1475, -inf
        %1480 = vmax.xlane.f32.xlu0 %v1479
        %v1481 = vpop.xlane.xlu0 %1480
        %v1482 = vsub.f32 %v1474, %v1478
        %v1483 = vsub.f32 %v1475, %v1481
        %v1484 = vmul.f32 %v1482, 1.442695
        %v1485 = vpow.pop %v1484
        %v1486 = vmul.f32 %v1483, 1.442695
        %v1487 = vpow.pop %v1486
        %v1488 = vsel %vm972, %v1485, 0.0
        %1489 = vadd.xlane.f32.xlu0 %v1488
        %v1490 = vpop.xlane.xlu0 %1489
        %v1491 = vsel %vm972, %v1487, 0.0
        %1492 = vadd.xlane.f32.xlu0 %v1491
        %v1493 = vpop.xlane.xlu0 %1492
        %v1494 = vrcp.pop %v1490
        %v1495 = vrcp.pop %v1493
        %v1496 = vmul.f32 %v1485, %v1494
        %v1497 = vmul.f32 %v1487, %v1495
        %v1499 = vsel %vm972, %v1496, 0
        %1501 = vmatpush.msra.mxu0 0.0
        %1502 = vmatpush.msra.mxu0 0.0
        %1503 = vmatpush.msra.mxu0 0.0
        %1504 = vmatpush.msra.mxu0 0.0
        %1505 = vmatpush.msra.mxu0 0.0
        %1506 = vmatpush.msra.mxu0 0.0
        %1507 = vmatpush.msra.mxu0 0.0
        %1508 = vmatpush.msra.mxu0 0.0
        %1509 = vmatpush.msra.mxu0 0.0
        %1510 = vmatpush.msra.mxu0 0.0
        %1511 = vmatpush.msra.mxu0 0.0
        %1512 = vmatpush.msra.mxu0 0.0
        %1513 = vmatpush.msra.mxu0 0.0
        %1514 = vmatpush.msra.mxu0 0.0
        %1515 = vmatpush.msra.mxu0 0.0
        %1516 = vmatpush.msra.mxu0 %v1418
        %1517 = vmatmul.f32.gmra.mxu0 %v1499
        %v1518 = vpop.f32.mrf.mxu0
        %v1519 = vadd.f32 0.0, %v1518
        %1520 = vdwg.mxu0
        %v1522 = vsel %vm972, %v1497, 0
        %1524 = vmatpush.msra.mxu0 0.0
        %1525 = vmatpush.msra.mxu0 0.0
        %1526 = vmatpush.msra.mxu0 0.0
        %1527 = vmatpush.msra.mxu0 0.0
        %1528 = vmatpush.msra.mxu0 0.0
        %1529 = vmatpush.msra.mxu0 0.0
        %1530 = vmatpush.msra.mxu0 0.0
        %1531 = vmatpush.msra.mxu0 0.0
        %1532 = vmatpush.msra.mxu0 0.0
        %1533 = vmatpush.msra.mxu0 0.0
        %1534 = vmatpush.msra.mxu0 0.0
        %1535 = vmatpush.msra.mxu0 0.0
        %1536 = vmatpush.msra.mxu0 0.0
        %1537 = vmatpush.msra.mxu0 0.0
        %1538 = vmatpush.msra.mxu0 0.0
        %1539 = vmatpush.msra.mxu0 %v1420
        %1540 = vmatmul.f32.gmra.mxu0 %v1522
        %v1541 = vpop.f32.mrf.mxu0
        %v1542 = vadd.f32 0.0, %v1541
        %1543 = vdwg.mxu0
        %1546 = vrot.lane.b32.xlu0 %v1519, 16
        %v1547 = vpop.permute.xlu0 %1546
        %1548 = vrot.lane.b32.xlu0 %v1542, 16
        %v1549 = vpop.permute.xlu0 %1548
        %vm1552 = vcmask 195712
        %1553 = vst.msk [vmem:[#allocation3] sm:$0xff] %vm1552, %v1547
        %1554 = vst.msk [vmem:[#allocation3 + $0x8] sm:$0xff] %vm1552, %v1549
        %s1555 = scalar_lea.vmem %s726, 48
        %v1556 = vld [vmem:[%s1555] sm:$0xf]
        %v1557 = vld [vmem:[%s1555 + $0x4] sm:$0xf]
        %v1558 = vld [vmem:[%s1555 + $0x8] sm:$0xf]
        %v1559 = vld [vmem:[%s1555 + $0xc] sm:$0xf]
        %v1564 = vunpack.c.l.b16 %v1556
        %v1565 = vunpack.c.l.b16 %v1557
        %v1566 = vunpack.c.l.b16 %v1558
        %v1567 = vunpack.c.l.b16 %v1559
        %v1568 = vpack.c.b16 %v1565, %v1564
        %v1569 = vpack.c.b16 %v1567, %v1566
        %1572 = vmatpush.bf16.msra.mxu0 0
        %1573 = vmatpush.bf16.msra.mxu0 0
        %1574 = vmatpush.bf16.msra.mxu0 0
        %1575 = vmatpush.bf16.msra.mxu0 0
        %1576 = vmatpush.bf16.msra.mxu0 0
        %1577 = vmatpush.bf16.msra.mxu0 0
        %1578 = vmatpush.bf16.msra.mxu0 %v1569
        %1579 = vmatpush.bf16.msra.mxu0 %v1568
        %1580 = vmatmul.bf16.gmra.mxu0 %v894
        %v1581 = vpop.f32.mrf.mxu0
        %v1582 = vadd.f32 0.0, %v1581
        %v1583 = vpop.f32.mrf.mxu0
        %v1584 = vadd.f32 0.0, %v1583
        %1585 = vdwg.mxu0
        %v1586 = vmul.f32 %v1582, 0.35355338
        %v1587 = vmul.f32 %v1584, 0.35355338
        %s1588 = scalar_lea.vmem %s731, 48
        %v1589 = vld [vmem:[%s1588] sm:$0xf]
        %v1590 = vld [vmem:[%s1588 + $0x4] sm:$0xf]
        %v1591 = vld [vmem:[%s1588 + $0x8] sm:$0xf]
        %v1592 = vld [vmem:[%s1588 + $0xc] sm:$0xf]
        %v1597 = vunpack.c.l.b16 %v1589
        %v1598 = vunpack.c.l.b16 %v1590
        %v1599 = vunpack.c.l.b16 %v1591
        %v1600 = vunpack.c.l.b16 %v1592
        %v1601 = vpack.c.b16 %v1598, %v1597
        %v1602 = vpack.c.b16 %v1600, %v1599
        %1605 = vmatpush.bf16.msra.mxu0 0
        %1606 = vmatpush.bf16.msra.mxu0 0
        %1607 = vmatpush.bf16.msra.mxu0 0
        %1608 = vmatpush.bf16.msra.mxu0 0
        %1609 = vmatpush.bf16.msra.mxu0 0
        %1610 = vmatpush.bf16.msra.mxu0 0
        %1611 = vmatpush.bf16.msra.mxu0 %v1602
        %1612 = vmatpush.bf16.msra.mxu0 %v1601
        %1613 = vmatmul.bf16.gmra.mxu0 %v894
        %v1614 = vpop.f32.mrf.mxu0
        %v1615 = vadd.f32 0.0, %v1614
        %v1616 = vpop.f32.mrf.mxu0
        %v1617 = vadd.f32 0.0, %v1616
        %1618 = vdwg.mxu0
        %s1619 = scalar_lea.vmem %s736, 48
        %v1620 = vld [vmem:[%s1619] sm:$0xf]
        %v1621 = vld [vmem:[%s1619 + $0x4] sm:$0xf]
        %v1622 = vld [vmem:[%s1619 + $0x8] sm:$0xf]
        %v1623 = vld [vmem:[%s1619 + $0xc] sm:$0xf]
        %v1628 = vunpack.c.l.b16 %v1620
        %v1629 = vunpack.c.l.b16 %v1621
        %v1630 = vunpack.c.l.b16 %v1622
        %v1631 = vunpack.c.l.b16 %v1623
        %v1632 = vpack.c.b16 %v1629, %v1628
        %v1633 = vpack.c.b16 %v1631, %v1630
        %1636 = vmatpush.bf16.msra.mxu0 0
        %1637 = vmatpush.bf16.msra.mxu0 0
        %1638 = vmatpush.bf16.msra.mxu0 0
        %1639 = vmatpush.bf16.msra.mxu0 0
        %1640 = vmatpush.bf16.msra.mxu0 0
        %1641 = vmatpush.bf16.msra.mxu0 0
        %1642 = vmatpush.bf16.msra.mxu0 %v1633
        %1643 = vmatpush.bf16.msra.mxu0 %v1632
        %1644 = vmatmul.bf16.gmra.mxu0 %v894
        %v1645 = vpop.f32.mrf.mxu0
        %v1646 = vadd.f32 0.0, %v1645
        %v1647 = vpop.f32.mrf.mxu0
        %v1648 = vadd.f32 0.0, %v1647
        %1649 = vdwg.mxu0
        %v1651 = vsel %vm972, %v1586, 0
        %v1654 = vsel %vm972, %v1615, 0
        %1656 = vmatpush.xpose.msra.mxu0 0.0
        %1657 = vmatpush.xpose.msra.mxu0 0.0
        %1658 = vmatpush.xpose.msra.mxu0 0.0
        %1659 = vmatpush.xpose.msra.mxu0 0.0
        %1660 = vmatpush.xpose.msra.mxu0 0.0
        %1661 = vmatpush.xpose.msra.mxu0 0.0
        %1662 = vmatpush.xpose.msra.mxu0 0.0
        %1663 = vmatpush.xpose.msra.mxu0 0.0
        %1664 = vmatpush.xpose.msra.mxu0 0.0
        %1665 = vmatpush.xpose.msra.mxu0 0.0
        %1666 = vmatpush.xpose.msra.mxu0 0.0
        %1667 = vmatpush.xpose.msra.mxu0 0.0
        %1668 = vmatpush.xpose.msra.mxu0 0.0
        %1669 = vmatpush.xpose.msra.mxu0 0.0
        %1670 = vmatpush.xpose.msra.mxu0 0.0
        %1671 = vmatpush.xpose.msra.mxu0 %v1654
        %1672 = vmatmul.f32.gmra.mxu0 %v1651
        %v1673 = vpop.f32.mrf.mxu0
        %v1674 = vadd.f32 0.0, %v1673
        %1675 = vdwg.mxu0
        %v1677 = vsel %vm972, %v1587, 0
        %v1680 = vsel %vm972, %v1617, 0
        %1682 = vmatpush.xpose.msra.mxu0 0.0
        %1683 = vmatpush.xpose.msra.mxu0 0.0
        %1684 = vmatpush.xpose.msra.mxu0 0.0
        %1685 = vmatpush.xpose.msra.mxu0 0.0
        %1686 = vmatpush.xpose.msra.mxu0 0.0
        %1687 = vmatpush.xpose.msra.mxu0 0.0
        %1688 = vmatpush.xpose.msra.mxu0 0.0
        %1689 = vmatpush.xpose.msra.mxu0 0.0
        %1690 = vmatpush.xpose.msra.mxu0 0.0
        %1691 = vmatpush.xpose.msra.mxu0 0.0
        %1692 = vmatpush.xpose.msra.mxu0 0.0
        %1693 = vmatpush.xpose.msra.mxu0 0.0
        %1694 = vmatpush.xpose.msra.mxu0 0.0
        %1695 = vmatpush.xpose.msra.mxu0 0.0
        %1696 = vmatpush.xpose.msra.mxu0 0.0
        %1697 = vmatpush.xpose.msra.mxu0 %v1680
        %1698 = vmatmul.f32.gmra.mxu0 %v1677
        %v1699 = vpop.f32.mrf.mxu0
        %v1700 = vadd.f32 0.0, %v1699
        %1701 = vdwg.mxu0
        %v1702 = vsel %vm1026, %v1674, -inf
        %v1703 = vsel %vm1026, %v1700, -inf
        %v1704 = vsel %vm972, %v1702, -inf
        %1705 = vmax.xlane.f32.xlu0 %v1704
        %v1706 = vpop.xlane.xlu0 %1705
        %v1707 = vsel %vm972, %v1703, -inf
        %1708 = vmax.xlane.f32.xlu0 %v1707
        %v1709 = vpop.xlane.xlu0 %1708
        %v1710 = vsub.f32 %v1702, %v1706
        %v1711 = vsub.f32 %v1703, %v1709
        %v1712 = vmul.f32 %v1710, 1.442695
        %v1713 = vpow.pop %v1712
        %v1714 = vmul.f32 %v1711, 1.442695
        %v1715 = vpow.pop %v1714
        %v1716 = vsel %vm972, %v1713, 0.0
        %1717 = vadd.xlane.f32.xlu0 %v1716
        %v1718 = vpop.xlane.xlu0 %1717
        %v1719 = vsel %vm972, %v1715, 0.0
        %1720 = vadd.xlane.f32.xlu0 %v1719
        %v1721 = vpop.xlane.xlu0 %1720
        %v1722 = vrcp.pop %v1718
        %v1723 = vrcp.pop %v1721
        %v1724 = vmul.f32 %v1713, %v1722
        %v1725 = vmul.f32 %v1715, %v1723
        %v1727 = vsel %vm972, %v1724, 0
        %1729 = vmatpush.msra.mxu0 0.0
        %1730 = vmatpush.msra.mxu0 0.0
        %1731 = vmatpush.msra.mxu0 0.0
        %1732 = vmatpush.msra.mxu0 0.0
        %1733 = vmatpush.msra.mxu0 0.0
        %1734 = vmatpush.msra.mxu0 0.0
        %1735 = vmatpush.msra.mxu0 0.0
        %1736 = vmatpush.msra.mxu0 0.0
        %1737 = vmatpush.msra.mxu0 0.0
        %1738 = vmatpush.msra.mxu0 0.0
        %1739 = vmatpush.msra.mxu0 0.0
        %1740 = vmatpush.msra.mxu0 0.0
        %1741 = vmatpush.msra.mxu0 0.0
        %1742 = vmatpush.msra.mxu0 0.0
        %1743 = vmatpush.msra.mxu0 0.0
        %1744 = vmatpush.msra.mxu0 %v1646
        %1745 = vmatmul.f32.gmra.mxu0 %v1727
        %v1746 = vpop.f32.mrf.mxu0
        %v1747 = vadd.f32 0.0, %v1746
        %1748 = vdwg.mxu0
        %v1750 = vsel %vm972, %v1725, 0
        %1752 = vmatpush.msra.mxu0 0.0
        %1753 = vmatpush.msra.mxu0 0.0
        %1754 = vmatpush.msra.mxu0 0.0
        %1755 = vmatpush.msra.mxu0 0.0
        %1756 = vmatpush.msra.mxu0 0.0
        %1757 = vmatpush.msra.mxu0 0.0
        %1758 = vmatpush.msra.mxu0 0.0
        %1759 = vmatpush.msra.mxu0 0.0
        %1760 = vmatpush.msra.mxu0 0.0
        %1761 = vmatpush.msra.mxu0 0.0
        %1762 = vmatpush.msra.mxu0 0.0
        %1763 = vmatpush.msra.mxu0 0.0
        %1764 = vmatpush.msra.mxu0 0.0
        %1765 = vmatpush.msra.mxu0 0.0
        %1766 = vmatpush.msra.mxu0 0.0
        %1767 = vmatpush.msra.mxu0 %v1648
        %1768 = vmatmul.f32.gmra.mxu0 %v1750
        %v1769 = vpop.f32.mrf.mxu0
        %v1770 = vadd.f32 0.0, %v1769
        %1771 = vdwg.mxu0
        %1774 = vrot.lane.b32.xlu0 %v1747, 24
        %v1775 = vpop.permute.xlu0 %1774
        %1776 = vrot.lane.b32.xlu0 %v1770, 24
        %v1777 = vpop.permute.xlu0 %1776
        %vm1780 = vcmask 261312
        %1781 = vst.msk [vmem:[#allocation3] sm:$0xff] %vm1780, %v1775
        %1782 = vst.msk [vmem:[#allocation3 + $0x8] sm:$0xff] %vm1780, %v1777
        %v1783 = vld [vmem:[#allocation3] sm:$0xff]
        %v1784 = vld [vmem:[#allocation3 + $0x8] sm:$0xff]
        %v1785 = vadd.f32 %v805, %v1783
        %v1786 = vadd.f32 %v806, %v1784
        %v1787 = vld [vmem:[%s745] sm:$0x1]
        %v1788 = vld [vmem:[%s748] sm:$0x1]
        %v1789 = vsel %vm809, %v1785, 0.0
        %1790 = vadd.xlane.f32.xlu0 %v1789
        %v1791 = vpop.xlane.xlu0 %1790
        %v1792 = vsel %vm809, %v1786, 0.0
        %1793 = vadd.xlane.f32.xlu0 %v1792
        %v1794 = vpop.xlane.xlu0 %1793
        %v1795 = vmul.f32 %v1791, %v822
        %v1796 = vmul.f32 %v1794, %v822
        %v1797 = vsub.f32 %v1785, %v1795
        %v1798 = vsub.f32 %v1786, %v1796
        %v1799 = vmul.f32 %v1797, %v1797
        %v1800 = vmul.f32 %v1798, %v1798
        %v1801 = vsel %vm809, %v1799, 0.0
        %1802 = vadd.xlane.f32.xlu0 %v1801
        %v1803 = vpop.xlane.xlu0 %1802
        %v1804 = vsel %vm809, %v1800, 0.0
        %1805 = vadd.xlane.f32.xlu0 %v1804
        %v1806 = vpop.xlane.xlu0 %1805
        %v1807 = vmul.f32 %v1803, %v822
        %v1808 = vmul.f32 %v1806, %v822
        %v1809 = vadd.f32 %v1807, 1e-05
        %v1810 = vadd.f32 %v1808, 1e-05
        %v1811 = vrsqrt.pop %v1809
        %v1812 = vmul.f32 %v1811, %v1809
        %v1813 = vmul.f32 %v1812, %v1811
        %v1814 = vmul.f32 0.5, %v1813
        %v1815 = vsub.f32 1.5, %v1814
        %v1816 = vmul.f32 %v1811, %v1815
        %vm1817 = vweird.f32 %v1809
        %vm1818 = vweird.f32 %v1811
        %vm1819 = vmor %vm1817, %vm1818
        %v1820 = vsel %vm1819, %v1811, %v1816
        %v1821 = vrsqrt.pop %v1810
        %v1822 = vmul.f32 %v1821, %v1810
        %v1823 = vmul.f32 %v1822, %v1821
        %v1824 = vmul.f32 0.5, %v1823
        %v1825 = vsub.f32 1.5, %v1824
        %v1826 = vmul.f32 %v1821, %v1825
        %vm1827 = vweird.f32 %v1810
        %vm1828 = vweird.f32 %v1821
        %vm1829 = vmor %vm1827, %vm1828
        %v1830 = vsel %vm1829, %v1821, %v1826
        %v1831 = vmul.f32 %v1797, %v1820
        %v1832 = vmul.f32 %v1798, %v1830
        %v1834 = vperm.slane %v1787, 0
        %v1836 = vmul.f32 %v1831, %v1834
        %v1837 = vmul.f32 %v1832, %v1834
        %v1839 = vperm.slane %v1788, 0
        %v1841 = vadd.f32 %v1836, %v1839
        %v1842 = vadd.f32 %v1837, %v1839
        %v1843 = vpack.c.bf16 %v1842, %v1841
        %v1844 = vld [vmem:[%s753] sm:$0xf]
        %v1845 = vld [vmem:[%s753 + $0x4] sm:$0xf]
        %v1846 = vld [vmem:[%s753 + $0x8] sm:$0xf]
        %v1847 = vld [vmem:[%s753 + $0xc] sm:$0xf]
        %v1848 = vld [vmem:[%s756] sm:$0x1]
        %v1850 = vperm.slane %v1848, 0
        %v1856 = vunpack.c.l.b16 %v1844
        %v1857 = vunpack.c.l.b16 %v1845
        %v1858 = vunpack.c.l.b16 %v1846
        %v1859 = vunpack.c.l.b16 %v1847
        %v1860 = vpack.c.b16 %v1857, %v1856
        %v1861 = vpack.c.b16 %v1859, %v1858
        %v1865 = vsel %vm809, %v1843, 0
        %1867 = vmatpush.bf16.msra.mxu0 0
        %1868 = vmatpush.bf16.msra.mxu0 0
        %1869 = vmatpush.bf16.msra.mxu0 0
        %1870 = vmatpush.bf16.msra.mxu0 0
        %1871 = vmatpush.bf16.msra.mxu0 0
        %1872 = vmatpush.bf16.msra.mxu0 0
        %1873 = vmatpush.bf16.msra.mxu0 %v1861
        %1874 = vmatpush.bf16.msra.mxu0 %v1860
        %1875 = vmatmul.bf16.gmra.mxu0 %v1865
        %v1876 = vpop.f32.mrf.mxu0
        %v1877 = vadd.f32 %v1850, %v1876
        %v1878 = vpop.f32.mrf.mxu0
        %v1879 = vadd.f32 %v1850, %v1878
        %1880 = vdwg.mxu0
        %v1881 = vmax.f32 %v1877, 0.0
        %v1882 = vmax.f32 %v1879, 0.0
        %v1883 = vpack.c.bf16 %v1882, %v1881
        %v1884 = vld [vmem:[%s761] sm:$0xf]
        %v1885 = vld [vmem:[%s761 + $0x4] sm:$0xf]
        %v1886 = vld [vmem:[%s761 + $0x8] sm:$0xf]
        %v1887 = vld [vmem:[%s761 + $0xc] sm:$0xf]
        %v1888 = vld [vmem:[%s761 + $0x10] sm:$0xf]
        %v1889 = vld [vmem:[%s761 + $0x14] sm:$0xf]
        %v1890 = vld [vmem:[%s761 + $0x18] sm:$0xf]
        %v1891 = vld [vmem:[%s761 + $0x1c] sm:$0xf]
        %v1892 = vld [vmem:[%s764] sm:$0x1]
        %v1894 = vperm.slane %v1892, 0
        %v1904 = vunpack.c.l.b16 %v1884
        %v1905 = vunpack.c.l.b16 %v1885
        %v1906 = vunpack.c.l.b16 %v1886
        %v1907 = vunpack.c.l.b16 %v1887
        %v1908 = vunpack.c.l.b16 %v1888
        %v1909 = vunpack.c.l.b16 %v1889
        %v1910 = vunpack.c.l.b16 %v1890
        %v1911 = vunpack.c.l.b16 %v1891
        %v1912 = vpack.c.b16 %v1905, %v1904
        %v1913 = vpack.c.b16 %v1907, %v1906
        %v1914 = vpack.c.b16 %v1909, %v1908
        %v1915 = vpack.c.b16 %v1911, %v1910
        %vm1920 = vcmask 523264
        %v1922 = vsel %vm1920, %v1883, 0
        %1924 = vmatpush.bf16.msra.mxu0 0
        %1925 = vmatpush.bf16.msra.mxu0 0
        %1926 = vmatpush.bf16.msra.mxu0 0
        %1927 = vmatpush.bf16.msra.mxu0 0
        %1928 = vmatpush.bf16.msra.mxu0 %v1915
        %1929 = vmatpush.bf16.msra.mxu0 %v1914
        %1930 = vmatpush.bf16.msra.mxu0 %v1913
        %1931 = vmatpush.bf16.msra.mxu0 %v1912
        %1932 = vmatmul.bf16.gmra.mxu0 %v1922
        %v1933 = vpop.f32.mrf.mxu0
        %v1934 = vadd.f32 %v1894, %v1933
        %v1935 = vpop.f32.mrf.mxu0
        %v1936 = vadd.f32 %v1894, %v1935
        %1937 = vdwg.mxu0
        %v1938 = vadd.f32 %v805, %v1785
        %v1939 = vadd.f32 %v806, %v1786
        %v1940 = vadd.f32 %v1938, %v1934
        %v1941 = vadd.f32 %v1939, %v1936
        %1942 = vst.msk [vmem:[#allocation2] sm:$0xff] %vm809, %v1940
        %1943 = vst.msk [vmem:[#allocation2 + $0x8] sm:$0xff] %vm809, %v1941
        %p1944 = scmp.eq.s32.totalorder %s35, 1
        // Predicated region
        $region97: #{decode_transformer.1} parent=91 // pred_check
          %p1945 = pneg %p1944
        $region98: #{decode_transformer.1} parent=91 // pred_check_branch
          %1947 = sbr.rel (%p1945) target = $region100
        $region99: #{decode_transformer.1} parent=91 // pred_region
          %v1948 = vld [vmem:[%s14] sm:$0x1]
          %v1949 = vld [vmem:[%s15] sm:$0x1]
          %v1950 = vsel %vm809, %v1940, 0.0
          %1951 = vadd.xlane.f32.xlu0 %v1950
          %v1952 = vpop.xlane.xlu0 %1951
          %v1953 = vsel %vm809, %v1941, 0.0
          %1954 = vadd.xlane.f32.xlu0 %v1953
          %v1955 = vpop.xlane.xlu0 %1954
          %v1956 = vmul.f32 %v1952, %v822
          %v1957 = vmul.f32 %v1955, %v822
          %v1958 = vsub.f32 %v1940, %v1956
          %v1959 = vsub.f32 %v1941, %v1957
          %v1960 = vmul.f32 %v1958, %v1958
          %v1961 = vmul.f32 %v1959, %v1959
          %v1962 = vsel %vm809, %v1960, 0.0
          %1963 = vadd.xlane.f32.xlu0 %v1962
          %v1964 = vpop.xlane.xlu0 %1963
          %v1965 = vsel %vm809, %v1961, 0.0
          %1966 = vadd.xlane.f32.xlu0 %v1965
          %v1967 = vpop.xlane.xlu0 %1966
          %v1968 = vmul.f32 %v1964, %v822
          %v1969 = vmul.f32 %v1967, %v822
          %v1970 = vadd.f32 %v1968, 1e-05
          %v1971 = vadd.f32 %v1969, 1e-05
          %v1972 = vrsqrt.pop %v1970
          %v1973 = vmul.f32 %v1972, %v1970
          %v1974 = vmul.f32 %v1973, %v1972
          %v1975 = vmul.f32 0.5, %v1974
          %v1976 = vsub.f32 1.5, %v1975
          %v1977 = vmul.f32 %v1972, %v1976
          %vm1978 = vweird.f32 %v1970
          %vm1979 = vweird.f32 %v1972
          %vm1980 = vmor %vm1978, %vm1979
          %v1981 = vsel %vm1980, %v1972, %v1977
          %v1982 = vrsqrt.pop %v1971
          %v1983 = vmul.f32 %v1982, %v1971
          %v1984 = vmul.f32 %v1983, %v1982
          %v1985 = vmul.f32 0.5, %v1984
          %v1986 = vsub.f32 1.5, %v1985
          %v1987 = vmul.f32 %v1982, %v1986
          %vm1988 = vweird.f32 %v1971
          %vm1989 = vweird.f32 %v1982
          %vm1990 = vmor %vm1988, %vm1989
          %v1991 = vsel %vm1990, %v1982, %v1987
          %v1992 = vmul.f32 %v1958, %v1981
          %v1993 = vmul.f32 %v1959, %v1991
          %v1995 = vperm.slane %v1948, 0
          %v1997 = vmul.f32 %v1992, %v1995
          %v1998 = vmul.f32 %v1993, %v1995
          %v2000 = vperm.slane %v1949, 0
          %v2002 = vadd.f32 %v1997, %v2000
          %v2003 = vadd.f32 %v1998, %v2000
          %v2004 = vpack.c.bf16 %v2003, %v2002
          %v2005 = vld [vmem:[%s16] sm:$0xf]
          %v2006 = vld [vmem:[%s16 + $0x4] sm:$0xf]
          %v2007 = vld [vmem:[%s16 + $0x8] sm:$0xf]
          %v2008 = vld [vmem:[%s16 + $0xc] sm:$0xf]
          %v2009 = vld [vmem:[%s17] sm:$0x1]
          %v2011 = vperm.slane %v2009, 0
          %v2017 = vunpack.c.l.b16 %v2005
          %v2018 = vunpack.c.l.b16 %v2006
          %v2019 = vunpack.c.l.b16 %v2007
          %v2020 = vunpack.c.l.b16 %v2008
          %v2021 = vpack.c.b16 %v2018, %v2017
          %v2022 = vpack.c.b16 %v2020, %v2019
          %v2026 = vsel %vm809, %v2004, 0
          %2028 = vmatpush.bf16.msra.mxu0 0
          %2029 = vmatpush.bf16.msra.mxu0 0
          %2030 = vmatpush.bf16.msra.mxu0 0
          %2031 = vmatpush.bf16.msra.mxu0 0
          %2032 = vmatpush.bf16.msra.mxu0 0
          %2033 = vmatpush.bf16.msra.mxu0 0
          %2034 = vmatpush.bf16.msra.mxu0 %v2022
          %2035 = vmatpush.bf16.msra.mxu0 %v2021
          %2036 = vmatmul.bf16.gmra.mxu0 %v2026
          %v2037 = vpop.f32.mrf.mxu0
          %v2038 = vadd.f32 %v2011, %v2037
          %v2039 = vpop.f32.mrf.mxu0
          %v2040 = vadd.f32 %v2011, %v2039
          %2041 = vdwg.mxu0
          %2042 = vst [vmem:[#allocation4] sm:$0xff] %v2038
          %2043 = vst [vmem:[#allocation4 + $0x8] sm:$0xff] %v2040
        $region100: #{decode_transformer.1} parent=91 // pred_fallthru
          _
        // Predicated region
        $region101: #{decode_transformer.1} parent=91 // pred_check
          %p2044 = pneg %p498
        $region102: #{decode_transformer.1} parent=91 // pred_check_branch
          %2046 = sbr.rel (%p2044) target = $region104
        $region103: #{decode_transformer.1} parent=91 // pred_region
          %s2047 = smul.u32 2, %s34
          %2049 = vsyncadd [#allocation5], 0
          %s2050 = smul.addr %s2047, 8
          %s2051 = scalar_lea.hbm %s18, %s2050
          %s2052 = sshll.u32 [#allocation4], 4
          %s2053 = int_to_ptr.vmem [resolvable:$true] %s2052
          %s2054 = sshll.u32 %s2051, 4
          %s2055 = int_to_ptr.hbm [resolvable:$true] %s2054
          %2060 = dma.vmem_to_hbm [thread:$0]  %s2053, 256, %s2055, [#allocation5], 128, 128, 8
        $region104: #{decode_transformer.1} parent=91 // pred_fallthru
          _
        // Predicated region
        $region105: #{decode_transformer.1} parent=91 // pred_check
          %p2061 = pneg %p498
        $region106: #{decode_transformer.1} parent=91 // pred_check_branch
          %2063 = sbr.rel (%p2061) target = $region108
        $region107: #{decode_transformer.1} parent=91 // pred_region
          %2065 = dma.done [#allocation5], 256
        $region108: #{decode_transformer.1} parent=91 // pred_fallthru
          _
      $region92: #{decode_transformer.1} parent=5 // pred_fallthru
        _
      %p2066 = scmp.le.s32.totalorder 2, %s25
      // Predicated region
      $region109: #{decode_transformer.1} parent=5 // pred_check
        %p2067 = pneg %p2066
      $region110: #{decode_transformer.1} parent=5 // pred_check_branch
        %2069 = sbr.rel (%p2067) target = $region112
      $region111: #{decode_transformer.1} parent=5 // pred_region
        %s2070 = ssub.s32 %s25, 2
      $region112: #{decode_transformer.1} parent=5 // pred_fallthru
        _
    $region6: #{decode_transformer.1} parent=1 // loop_footer
      %s29 = sadd.s32 1, %s25
    $region7: #{decode_transformer.1} parent=1 // loop_footer_branch
      %24 = sbr.rel target = $region3
    $region8: #{decode_transformer.1} parent=1 // loop_exit
      _
    %2071 = vsyncpa [#allocation5], 1
    %s2072 = scalar_lea.sflag [#allocation5], 1
    %2073 = vsyncpa %s2072, 1

</llo_original>
